<compile_context>
chip_gen: v6e
topology: v6e:2x2x1
jax: 0.10.0
libtpu: 0.0.40
codegen_flags: <defaults>
</compile_context>

<pallas_src>
from math import floor

import jax
import jax.numpy as jnp
from jax.experimental import pallas as pl
from jax.experimental.pallas import tpu as pltpu


_NEG_SENTINEL = -1e30  # finite sentinel for masked max-pool (avoids -inf/NaN)


# ----------------------------------------------------------------------------
# Fused per-ensemble-member forward.  One grid step == one member.
# ----------------------------------------------------------------------------
def ensemble_member_kernel(a_ref, x_ref, maskt_ref, mol_ref,
                           w0_ref, b0_ref, w1c_ref, b1c_ref,
                           wm_ref, bm_ref,
                           w1max_ref, w1add_ref, w1mol_ref, b1_ref,
                           w2_ref, b2_ref,
                           o_ref):
    f32 = jnp.float32
    bf16 = jnp.bfloat16

    a = a_ref[...]                                              # [N, N] bf16
    x = x_ref[...]                                              # [N, F] bf16

    # conv0: ReLU(A_hat @ (X @ W0) + b0)   (F != H -> no residual)
    xw = jnp.dot(x, w0_ref[...], preferred_element_type=f32)
    h0 = jnp.dot(a, xw.astype(bf16), preferred_element_type=f32)
    h0 = jnp.maximum(h0 + b0_ref[...], 0.0)                     # [N, H] f32

    # conv1: ReLU(A_hat @ (h0 @ W1) + b1) + h0   (H == H -> residual)
    hw = jnp.dot(h0.astype(bf16), w1c_ref[...], preferred_element_type=f32)
    h1 = jnp.dot(a, hw.astype(bf16), preferred_element_type=f32)
    h1 = jnp.maximum(h1 + b1c_ref[...], 0.0) + h0               # [N, H] f32
    h1b = h1.astype(bf16)

    # Global pooling.  mask_T is [G, N] (graphs on sublanes, nodes on lanes).
    mt = maskt_ref[...]                                         # [G, N] bf16
    # add (sum) pool on the MXU:  [G, N] @ [N, H]
    add_pool = jnp.dot(mt, h1b, preferred_element_type=f32)     # [G, H] f32
    # max pool: masked reduce over the node axis, finite sentinel
    masked = jnp.where(mt[:, :, None] > 0.5, h1[None, :, :], _NEG_SENTINEL)
    max_pool = jnp.max(masked, axis=1)                          # [G, H] f32

    # Molecular head: Linear -> Dropout(id) -> BatchNorm(folded) -> ReLU
    mh = jnp.dot(mol_ref[...], wm_ref[...], preferred_element_type=f32)
    mh = jnp.maximum(mh + bm_ref[...], 0.0)                     # [G, H/4] f32

    # MLP: cat([max_pool, add_pool, mh]) @ W1  ==  sum of partitioned matmuls
    h = (jnp.dot(max_pool.astype(bf16), w1max_ref[...], preferred_element_type=f32)
         + jnp.dot(add_pool.astype(bf16), w1add_ref[...], preferred_element_type=f32)
         + jnp.dot(mh.astype(bf16), w1mol_ref[...], preferred_element_type=f32)
         + b1_ref[...])
    h = jnp.maximum(h, 0.0)                                     # [G, H] f32
    out = jnp.dot(h.astype(bf16), w2_ref[...], preferred_element_type=f32)
    o_ref[...] = (out + b2_ref[...]).astype(o_ref.dtype)        # [G, OUT]


# ----------------------------------------------------------------------------
# Wrapper: one pallas_call over the ensemble axis, then mean/var in JAX.
# ----------------------------------------------------------------------------
def ensemble_forward(params, a_hat, x, mask_t, mol):
    n_models, f_in, h_dim = params["w0"].shape
    n = x.shape[0]
    g, _ = mask_t.shape
    m_dim = mol.shape[1]
    hq = params["wm"].shape[2]
    out_dim = params["w2"].shape[2]

    def shared(shape):
        return pl.BlockSpec(shape, lambda e, _s=shape: (0,) * len(_s))

    def member(shape):
        return pl.BlockSpec((None,) + shape,
                            lambda e, _s=shape: (e,) + (0,) * len(_s))

    logits = pl.pallas_call(
        ensemble_member_kernel,
        out_shape=jax.ShapeDtypeStruct((n_models, g, out_dim), jnp.float32),
        grid_spec=pltpu.PrefetchScalarGridSpec(
            num_scalar_prefetch=0,
            grid=(n_models,),
            in_specs=[
                shared((n, n)),                                   # a_hat
                shared((n, f_in)),                                # x
                shared((g, n)),                                   # mask_T
                shared((g, m_dim)),                               # molecule feats
                member((f_in, h_dim)), member((1, h_dim)),        # conv0 w, b
                member((h_dim, h_dim)), member((1, h_dim)),       # conv1 w, b
                member((m_dim, hq)), member((1, hq)),             # mol head (BN folded)
                member((h_dim, h_dim)),                           # W1[:H]   (max)
                member((h_dim, h_dim)),                           # W1[H:2H] (add)
                member((hq, h_dim)),                              # W1[2H:]  (mol)
                member((1, h_dim)),                               # b1
                member((h_dim, out_dim)), member((1, out_dim)),   # w2, b2
            ],
            out_specs=member((g, out_dim)),
        ),
        compiler_params=pltpu.CompilerParams(
            dimension_semantics=("parallel",)),
    )(a_hat, x, mask_t, mol,
      params["w0"], params["b0"], params["w1c"], params["b1c"],
      params["wm"], params["bm"],
      params["w1max"], params["w1add"], params["w1mol"], params["b1"],
      params["w2"], params["b2"])

    # EnsembleNetwork.forward: mean + unbiased variance over members.
    return {"logits": jnp.mean(logits, axis=0),
            "logits_var": jnp.var(logits, axis=0, ddof=1)}


# ----------------------------------------------------------------------------
# Parameter / input construction.
# ----------------------------------------------------------------------------
def init_ensemble_params(key, n_models, in_features, hidden, out_features,
                         molecule_features):
    hq = hidden // 4
    mlp_in = floor((2 + 0.25) * hidden)          # molecule features present
    eps = 1e-5
    bn_scale = 1.0 / float(jnp.sqrt(1.0 + eps))  # BN eval, fresh stats (mean=0, var=1)

    def w(k, shape):
        return 0.1 * jax.random.normal(k, shape, jnp.float32)

    members = []
    for mk in jax.random.split(key, n_models):
        ks = jax.random.split(mk, 8)
        w1_full = w(ks[4], (mlp_in, hidden))
        members.append({
            "w0": w(ks[0], (in_features, hidden)),
            "b0": jnp.zeros((1, hidden), jnp.float32),
            "w1c": w(ks[1], (hidden, hidden)),
            "b1c": jnp.zeros((1, hidden), jnp.float32),
            # BatchNorm folded into the molecular Linear (scale > 0, beta=0).
            "wm": w(ks[2], (molecule_features, hq)) * bn_scale,
            "bm": w(ks[3], (1, hq)) * bn_scale,
            "w1max": w1_full[:hidden],
            "w1add": w1_full[hidden:2 * hidden],
            "w1mol": w1_full[2 * hidden:],
            "b1": jnp.zeros((1, hidden), jnp.float32),
            "w2": w(ks[5], (hidden, out_features)),
            "b2": w(ks[6], (1, out_features)),
        })

    # Stack along a leading E axis; bf16 for matmul operands, f32 for biases.
    stacked = {}
    for name in members[0]:
        arr = jnp.stack([m[name] for m in members], axis=0)
        stacked[name] = arr.astype(
            jnp.float32 if name.startswith("b") else jnp.bfloat16)
    return stacked


def build_graph_inputs(key, n_nodes, n_graphs, in_features, molecule_features):
    """Deterministic synthetic batched graph: G ring graphs of equal size."""
    per = n_nodes // n_graphs
    src, dst = [], []
    for g in range(n_graphs):
        base = g * per
        for i in range(per):
            a, b = base + i, base + (i + 1) % per
            src += [a, b]
            dst += [b, a]
    adj = jnp.zeros((n_nodes, n_nodes), jnp.float32)
    adj = adj.at[jnp.array(src), jnp.array(dst)].set(1.0)
    adj = adj + jnp.eye(n_nodes, dtype=jnp.float32)           # self loops
    deg = adj.sum(axis=1)
    dinv = 1.0 / jnp.sqrt(deg)
    a_hat = adj * dinv[:, None] * dinv[None, :]               # D^-1/2 (A+I) D^-1/2

    batch = jnp.repeat(jnp.arange(n_graphs), per)
    mask_t = jax.nn.one_hot(batch, n_graphs, dtype=jnp.float32).T  # [G, N]

    kx, km = jax.random.split(key)
    x = jax.random.normal(kx, (n_nodes, in_features), jnp.float32)
    mol = jax.random.normal(km, (n_graphs, molecule_features), jnp.float32)

    return (a_hat.astype(jnp.bfloat16), x.astype(jnp.bfloat16),
            mask_t.astype(jnp.bfloat16), mol.astype(jnp.bfloat16))


if __name__ == "__main__":
    IN_FEATURES = 8
    HIDDEN = 128            # lane-width-aligned hidden dim
    OUT_FEATURES = 4
    MOLECULE_FEATURES = 8
    N_NODES = 16
    N_GRAPHS = 2
    N_MODELS = 3            # ensemble size

    key = jax.random.PRNGKey(0)
    k_params, k_data = jax.random.split(key)

    params = init_ensemble_params(k_params, N_MODELS, IN_FEATURES, HIDDEN,
                                  OUT_FEATURES, MOLECULE_FEATURES)
    a_hat, x, mask_t, mol = build_graph_inputs(
        k_data, N_NODES, N_GRAPHS, IN_FEATURES, MOLECULE_FEATURES)

    fwd = jax.jit(ensemble_forward)
    out = fwd(params, a_hat, x, mask_t, mol)
    out = jax.block_until_ready(out)

    assert out["logits"].shape == (N_GRAPHS, OUT_FEATURES)
    assert out["logits_var"].shape == (N_GRAPHS, OUT_FEATURES)
    assert bool(jnp.all(jnp.isfinite(out["logits"])))
    assert bool(jnp.all(jnp.isfinite(out["logits_var"])))
    print("KERNEL_OK")
</pallas_src>

<mosaic_0001>
module attributes {stable_mosaic.version = 11 : i64} {
  func.func @ensemble_member_kernel(%arg0: i32, %arg1: memref<16x16xbf16, #tpu.memory_space<vmem>>, %arg2: memref<16x8xbf16, #tpu.memory_space<vmem>>, %arg3: memref<2x16xbf16, #tpu.memory_space<vmem>>, %arg4: memref<2x8xbf16, #tpu.memory_space<vmem>>, %arg5: memref<1x8x128xbf16, #tpu.memory_space<vmem>>, %arg6: memref<1x1x128xf32, #tpu.memory_space<vmem>>, %arg7: memref<1x128x128xbf16, #tpu.memory_space<vmem>>, %arg8: memref<1x1x128xf32, #tpu.memory_space<vmem>>, %arg9: memref<1x8x32xbf16, #tpu.memory_space<vmem>>, %arg10: memref<1x1x32xf32, #tpu.memory_space<vmem>>, %arg11: memref<1x128x128xbf16, #tpu.memory_space<vmem>>, %arg12: memref<1x128x128xbf16, #tpu.memory_space<vmem>>, %arg13: memref<1x32x128xbf16, #tpu.memory_space<vmem>>, %arg14: memref<1x1x128xf32, #tpu.memory_space<vmem>>, %arg15: memref<1x128x4xbf16, #tpu.memory_space<vmem>>, %arg16: memref<1x1x4xf32, #tpu.memory_space<vmem>>, %arg17: memref<1x2x4xf32, #tpu.memory_space<vmem>>) attributes {dimension_semantics = [#tpu.dimension_semantics<parallel>], iteration_bounds = array<i64: 3>, scalar_prefetch = 0 : i64, scratch_operands = 0 : i64, tpu.core_type = #tpu.core_type<tc>, window_params = [{pipeline_mode = #tpu.pipeline_mode<synchronous>, transform_indices = @transform_0, window_bounds = array<i64: 16, 16>}, {pipeline_mode = #tpu.pipeline_mode<synchronous>, transform_indices = @transform_1, window_bounds = array<i64: 16, 8>}, {pipeline_mode = #tpu.pipeline_mode<synchronous>, transform_indices = @transform_2, window_bounds = array<i64: 2, 16>}, {pipeline_mode = #tpu.pipeline_mode<synchronous>, transform_indices = @transform_3, window_bounds = array<i64: 2, 8>}, {transform_indices = @transform_4, window_bounds = array<i64: 1, 8, 128>}, {transform_indices = @transform_5, window_bounds = array<i64: 1, 1, 128>}, {transform_indices = @transform_6, window_bounds = array<i64: 1, 128, 128>}, {transform_indices = @transform_7, window_bounds = array<i64: 1, 1, 128>}, {transform_indices = @transform_8, window_bounds = array<i64: 1, 8, 32>}, {transform_indices = @transform_9, window_bounds = array<i64: 1, 1, 32>}, {transform_indices = @transform_10, window_bounds = array<i64: 1, 128, 128>}, {transform_indices = @transform_11, window_bounds = array<i64: 1, 128, 128>}, {transform_indices = @transform_12, window_bounds = array<i64: 1, 32, 128>}, {transform_indices = @transform_13, window_bounds = array<i64: 1, 1, 128>}, {transform_indices = @transform_14, window_bounds = array<i64: 1, 128, 4>}, {transform_indices = @transform_15, window_bounds = array<i64: 1, 1, 4>}, {transform_indices = @transform_16, window_bounds = array<i64: 1, 2, 4>}]} {
    %c0 = arith.constant 0 : index
    %c0_0 = arith.constant 0 : index
    %0 = vector.load %arg1[%c0, %c0_0] : memref<16x16xbf16, #tpu.memory_space<vmem>>, vector<16x16xbf16>
    %c0_1 = arith.constant 0 : index
    %c0_2 = arith.constant 0 : index
    %1 = vector.load %arg2[%c0_1, %c0_2] : memref<16x8xbf16, #tpu.memory_space<vmem>>, vector<16x8xbf16>
    %c0_3 = arith.constant 0 : index
    %c0_4 = arith.constant 0 : index
    %c0_5 = arith.constant 0 : index
    %2 = vector.load %arg5[%c0_3, %c0_4, %c0_5] : memref<1x8x128xbf16, #tpu.memory_space<vmem>>, vector<1x8x128xbf16>
    %3 = vector.shape_cast %2 : vector<1x8x128xbf16> to vector<8x128xbf16>
    %cst = arith.constant dense<0.000000e+00> : vector<16x128xf32>
    %4 = tpu.matmul %1, %3, %cst {dimension_numbers = #tpu.dot_dimension_numbers<[1], [0], [0], [1], [0, 0, 1, 1], [], []>} : vector<16x8xbf16>, vector<8x128xbf16>, vector<16x128xf32> -> vector<16x128xf32>
    %5 = arith.truncf %4 : vector<16x128xf32> to vector<16x128xbf16>
    %cst_6 = arith.constant dense<0.000000e+00> : vector<16x128xf32>
    %6 = tpu.matmul %0, %5, %cst_6 {dimension_numbers = #tpu.dot_dimension_numbers<[1], [0], [0], [1], [0, 0, 1, 1], [], []>} : vector<16x16xbf16>, vector<16x128xbf16>, vector<16x128xf32> -> vector<16x128xf32>
    %c0_7 = arith.constant 0 : index
    %c0_8 = arith.constant 0 : index
    %c0_9 = arith.constant 0 : index
    %7 = vector.load %arg6[%c0_7, %c0_8, %c0_9] : memref<1x1x128xf32, #tpu.memory_space<vmem>>, vector<1x1x128xf32>
    %8 = vector.shape_cast %7 : vector<1x1x128xf32> to vector<1x128xf32>
    %9 = vector.broadcast %8 : vector<1x128xf32> to vector<16x128xf32>
    %10 = arith.addf %6, %9 : vector<16x128xf32>
    %cst_10 = arith.constant 0.000000e+00 : f32
    %11 = vector.broadcast %cst_10 : f32 to vector<16x128xf32>
    %12 = arith.maximumf %10, %11 : vector<16x128xf32>
    %13 = arith.truncf %12 : vector<16x128xf32> to vector<16x128xbf16>
    %c0_11 = arith.constant 0 : index
    %c0_12 = arith.constant 0 : index
    %c0_13 = arith.constant 0 : index
    %14 = vector.load %arg7[%c0_11, %c0_12, %c0_13] : memref<1x128x128xbf16, #tpu.memory_space<vmem>>, vector<1x128x128xbf16>
    %15 = vector.shape_cast %14 : vector<1x128x128xbf16> to vector<128x128xbf16>
    %cst_14 = arith.constant dense<0.000000e+00> : vector<16x128xf32>
    %16 = tpu.matmul %13, %15, %cst_14 {dimension_numbers = #tpu.dot_dimension_numbers<[1], [0], [0], [1], [0, 0, 1, 1], [], []>} : vector<16x128xbf16>, vector<128x128xbf16>, vector<16x128xf32> -> vector<16x128xf32>
    %17 = arith.truncf %16 : vector<16x128xf32> to vector<16x128xbf16>
    %cst_15 = arith.constant dense<0.000000e+00> : vector<16x128xf32>
    %18 = tpu.matmul %0, %17, %cst_15 {dimension_numbers = #tpu.dot_dimension_numbers<[1], [0], [0], [1], [0, 0, 1, 1], [], []>} : vector<16x16xbf16>, vector<16x128xbf16>, vector<16x128xf32> -> vector<16x128xf32>
    %c0_16 = arith.constant 0 : index
    %c0_17 = arith.constant 0 : index
    %c0_18 = arith.constant 0 : index
    %19 = vector.load %arg8[%c0_16, %c0_17, %c0_18] : memref<1x1x128xf32, #tpu.memory_space<vmem>>, vector<1x1x128xf32>
    %20 = vector.shape_cast %19 : vector<1x1x128xf32> to vector<1x128xf32>
    %21 = vector.broadcast %20 : vector<1x128xf32> to vector<16x128xf32>
    %22 = arith.addf %18, %21 : vector<16x128xf32>
    %cst_19 = arith.constant 0.000000e+00 : f32
    %23 = vector.broadcast %cst_19 : f32 to vector<16x128xf32>
    %24 = arith.maximumf %22, %23 : vector<16x128xf32>
    %25 = arith.addf %24, %12 : vector<16x128xf32>
    %26 = arith.truncf %25 : vector<16x128xf32> to vector<16x128xbf16>
    %c0_20 = arith.constant 0 : index
    %c0_21 = arith.constant 0 : index
    %27 = vector.load %arg3[%c0_20, %c0_21] : memref<2x16xbf16, #tpu.memory_space<vmem>>, vector<2x16xbf16>
    %cst_22 = arith.constant dense<0.000000e+00> : vector<2x128xf32>
    %28 = tpu.matmul %27, %26, %cst_22 {dimension_numbers = #tpu.dot_dimension_numbers<[1], [0], [0], [1], [0, 0, 1, 1], [], []>} : vector<2x16xbf16>, vector<16x128xbf16>, vector<2x128xf32> -> vector<2x128xf32>
    %29 = vector.shape_cast %27 : vector<2x16xbf16> to vector<2x16x1xbf16>
    %cst_23 = arith.constant 5.000000e-01 : bf16
    %30 = vector.broadcast %cst_23 : bf16 to vector<2x16x1xbf16>
    %31 = arith.cmpf ogt, %29, %30 : vector<2x16x1xbf16>
    %32 = vector.shape_cast %25 : vector<16x128xf32> to vector<1x16x128xf32>
    %cst_24 = arith.constant -1.000000e+30 : f32
    %33 = vector.shape_cast %31 : vector<2x16x1xi1> to vector<2x16x1xi1>
    %34 = vector.broadcast %33 : vector<2x16x1xi1> to vector<2x16x128xi1>
    %35 = vector.shape_cast %32 : vector<1x16x128xf32> to vector<1x16x128xf32>
    %36 = vector.broadcast %35 : vector<1x16x128xf32> to vector<2x16x128xf32>
    %37 = vector.broadcast %cst_24 : f32 to vector<2x16x128xf32>
    %38 = arith.select %34, %36, %37 : vector<2x16x128xi1>, vector<2x16x128xf32>
    %cst_25 = arith.constant dense<0xFF800000> : vector<2x128xf32>
    %39 = vector.multi_reduction <maximumf>, %38, %cst_25 [1] : vector<2x16x128xf32> to vector<2x128xf32>
    %c0_26 = arith.constant 0 : index
    %c0_27 = arith.constant 0 : index
    %40 = vector.load %arg4[%c0_26, %c0_27] : memref<2x8xbf16, #tpu.memory_space<vmem>>, vector<2x8xbf16>
    %c0_28 = arith.constant 0 : index
    %c0_29 = arith.constant 0 : index
    %c0_30 = arith.constant 0 : index
    %41 = vector.load %arg9[%c0_28, %c0_29, %c0_30] : memref<1x8x32xbf16, #tpu.memory_space<vmem>>, vector<1x8x32xbf16>
    %42 = vector.shape_cast %41 : vector<1x8x32xbf16> to vector<8x32xbf16>
    %cst_31 = arith.constant dense<0.000000e+00> : vector<2x32xf32>
    %43 = tpu.matmul %40, %42, %cst_31 {dimension_numbers = #tpu.dot_dimension_numbers<[1], [0], [0], [1], [0, 0, 1, 1], [], []>} : vector<2x8xbf16>, vector<8x32xbf16>, vector<2x32xf32> -> vector<2x32xf32>
    %c0_32 = arith.constant 0 : index
    %c0_33 = arith.constant 0 : index
    %c0_34 = arith.constant 0 : index
    %44 = vector.load %arg10[%c0_32, %c0_33, %c0_34] : memref<1x1x32xf32, #tpu.memory_space<vmem>>, vector<1x1x32xf32>
    %45 = vector.shape_cast %44 : vector<1x1x32xf32> to vector<1x32xf32>
    %46 = vector.broadcast %45 : vector<1x32xf32> to vector<2x32xf32>
    %47 = arith.addf %43, %46 : vector<2x32xf32>
    %cst_35 = arith.constant 0.000000e+00 : f32
    %48 = vector.broadcast %cst_35 : f32 to vector<2x32xf32>
    %49 = arith.maximumf %47, %48 : vector<2x32xf32>
    %50 = arith.truncf %39 : vector<2x128xf32> to vector<2x128xbf16>
    %c0_36 = arith.constant 0 : index
    %c0_37 = arith.constant 0 : index
    %c0_38 = arith.constant 0 : index
    %51 = vector.load %arg11[%c0_36, %c0_37, %c0_38] : memref<1x128x128xbf16, #tpu.memory_space<vmem>>, vector<1x128x128xbf16>
    %52 = vector.shape_cast %51 : vector<1x128x128xbf16> to vector<128x128xbf16>
    %cst_39 = arith.constant dense<0.000000e+00> : vector<2x128xf32>
    %53 = tpu.matmul %50, %52, %cst_39 {dimension_numbers = #tpu.dot_dimension_numbers<[1], [0], [0], [1], [0, 0, 1, 1], [], []>} : vector<2x128xbf16>, vector<128x128xbf16>, vector<2x128xf32> -> vector<2x128xf32>
    %54 = arith.truncf %28 : vector<2x128xf32> to vector<2x128xbf16>
    %c0_40 = arith.constant 0 : index
    %c0_41 = arith.constant 0 : index
    %c0_42 = arith.constant 0 : index
    %55 = vector.load %arg12[%c0_40, %c0_41, %c0_42] : memref<1x128x128xbf16, #tpu.memory_space<vmem>>, vector<1x128x128xbf16>
    %56 = vector.shape_cast %55 : vector<1x128x128xbf16> to vector<128x128xbf16>
    %cst_43 = arith.constant dense<0.000000e+00> : vector<2x128xf32>
    %57 = tpu.matmul %54, %56, %cst_43 {dimension_numbers = #tpu.dot_dimension_numbers<[1], [0], [0], [1], [0, 0, 1, 1], [], []>} : vector<2x128xbf16>, vector<128x128xbf16>, vector<2x128xf32> -> vector<2x128xf32>
    %58 = arith.addf %53, %57 : vector<2x128xf32>
    %59 = arith.truncf %49 : vector<2x32xf32> to vector<2x32xbf16>
    %c0_44 = arith.constant 0 : index
    %c0_45 = arith.constant 0 : index
    %c0_46 = arith.constant 0 : index
    %60 = vector.load %arg13[%c0_44, %c0_45, %c0_46] : memref<1x32x128xbf16, #tpu.memory_space<vmem>>, vector<1x32x128xbf16>
    %61 = vector.shape_cast %60 : vector<1x32x128xbf16> to vector<32x128xbf16>
    %cst_47 = arith.constant dense<0.000000e+00> : vector<2x128xf32>
    %62 = tpu.matmul %59, %61, %cst_47 {dimension_numbers = #tpu.dot_dimension_numbers<[1], [0], [0], [1], [0, 0, 1, 1], [], []>} : vector<2x32xbf16>, vector<32x128xbf16>, vector<2x128xf32> -> vector<2x128xf32>
    %63 = arith.addf %58, %62 : vector<2x128xf32>
    %c0_48 = arith.constant 0 : index
    %c0_49 = arith.constant 0 : index
    %c0_50 = arith.constant 0 : index
    %64 = vector.load %arg14[%c0_48, %c0_49, %c0_50] : memref<1x1x128xf32, #tpu.memory_space<vmem>>, vector<1x1x128xf32>
    %65 = vector.shape_cast %64 : vector<1x1x128xf32> to vector<1x128xf32>
    %66 = vector.broadcast %65 : vector<1x128xf32> to vector<2x128xf32>
    %67 = arith.addf %63, %66 : vector<2x128xf32>
    %cst_51 = arith.constant 0.000000e+00 : f32
    %68 = vector.broadcast %cst_51 : f32 to vector<2x128xf32>
    %69 = arith.maximumf %67, %68 : vector<2x128xf32>
    %70 = arith.truncf %69 : vector<2x128xf32> to vector<2x128xbf16>
    %c0_52 = arith.constant 0 : index
    %c0_53 = arith.constant 0 : index
    %c0_54 = arith.constant 0 : index
    %71 = vector.load %arg15[%c0_52, %c0_53, %c0_54] : memref<1x128x4xbf16, #tpu.memory_space<vmem>>, vector<1x128x4xbf16>
    %72 = vector.shape_cast %71 : vector<1x128x4xbf16> to vector<128x4xbf16>
    %cst_55 = arith.constant dense<0.000000e+00> : vector<2x4xf32>
    %73 = tpu.matmul %70, %72, %cst_55 {dimension_numbers = #tpu.dot_dimension_numbers<[1], [0], [0], [1], [0, 0, 1, 1], [], []>} : vector<2x128xbf16>, vector<128x4xbf16>, vector<2x4xf32> -> vector<2x4xf32>
    %c0_56 = arith.constant 0 : index
    %c0_57 = arith.constant 0 : index
    %c0_58 = arith.constant 0 : index
    %74 = vector.load %arg16[%c0_56, %c0_57, %c0_58] : memref<1x1x4xf32, #tpu.memory_space<vmem>>, vector<1x1x4xf32>
    %75 = vector.shape_cast %74 : vector<1x1x4xf32> to vector<1x4xf32>
    %76 = vector.broadcast %75 : vector<1x4xf32> to vector<2x4xf32>
    %77 = arith.addf %73, %76 : vector<2x4xf32>
    %c0_59 = arith.constant 0 : index
    %c0_60 = arith.constant 0 : index
    %c0_61 = arith.constant 0 : index
    %78 = vector.load %arg17[%c0_59, %c0_60, %c0_61] : memref<1x2x4xf32, #tpu.memory_space<vmem>>, vector<1x2x4xf32>
    %79 = vector.shape_cast %78 : vector<1x2x4xf32> to vector<2x4xf32>
    %80 = vector.shape_cast %77 : vector<2x4xf32> to vector<1x2x4xf32>
    tpu.vector_store %arg17[%c0_59, %c0_60, %c0_61], %80 {strides = array<i32>} : memref<1x2x4xf32, #tpu.memory_space<vmem>>, vector<1x2x4xf32>,
    return
  }
  func.func @transform_0(%arg0: i32) -> (i32, i32) {
    %c0_i32 = arith.constant 0 : i32
    %c0_i32_0 = arith.constant 0 : i32
    %c0_i32_1 = arith.constant 0 : i32
    return %c0_i32, %c0_i32_0 : i32, i32
  }
  func.func @transform_1(%arg0: i32) -> (i32, i32) {
    %c0_i32 = arith.constant 0 : i32
    %c0_i32_0 = arith.constant 0 : i32
    %c0_i32_1 = arith.constant 0 : i32
    return %c0_i32, %c0_i32_0 : i32, i32
  }
  func.func @transform_2(%arg0: i32) -> (i32, i32) {
    %c0_i32 = arith.constant 0 : i32
    %c0_i32_0 = arith.constant 0 : i32
    %c0_i32_1 = arith.constant 0 : i32
    return %c0_i32, %c0_i32_0 : i32, i32
  }
  func.func @transform_3(%arg0: i32) -> (i32, i32) {
    %c0_i32 = arith.constant 0 : i32
    %c0_i32_0 = arith.constant 0 : i32
    %c0_i32_1 = arith.constant 0 : i32
    return %c0_i32, %c0_i32_0 : i32, i32
  }
  func.func @transform_4(%arg0: i32) -> (i32, i32, i32) {
    %c0_i32 = arith.constant 0 : i32
    %c0_i32_0 = arith.constant 0 : i32
    %c0_i32_1 = arith.constant 0 : i32
    return %arg0, %c0_i32, %c0_i32_0 : i32, i32, i32
  }
  func.func @transform_5(%arg0: i32) -> (i32, i32, i32) {
    %c0_i32 = arith.constant 0 : i32
    %c0_i32_0 = arith.constant 0 : i32
    %c0_i32_1 = arith.constant 0 : i32
    return %arg0, %c0_i32, %c0_i32_0 : i32, i32, i32
  }
  func.func @transform_6(%arg0: i32) -> (i32, i32, i32) {
    %c0_i32 = arith.constant 0 : i32
    %c0_i32_0 = arith.constant 0 : i32
    %c0_i32_1 = arith.constant 0 : i32
    return %arg0, %c0_i32, %c0_i32_0 : i32, i32, i32
  }
  func.func @transform_7(%arg0: i32) -> (i32, i32, i32) {
    %c0_i32 = arith.constant 0 : i32
    %c0_i32_0 = arith.constant 0 : i32
    %c0_i32_1 = arith.constant 0 : i32
    return %arg0, %c0_i32, %c0_i32_0 : i32, i32, i32
  }
  func.func @transform_8(%arg0: i32) -> (i32, i32, i32) {
    %c0_i32 = arith.constant 0 : i32
    %c0_i32_0 = arith.constant 0 : i32
    %c0_i32_1 = arith.constant 0 : i32
    return %arg0, %c0_i32, %c0_i32_0 : i32, i32, i32
  }
  func.func @transform_9(%arg0: i32) -> (i32, i32, i32) {
    %c0_i32 = arith.constant 0 : i32
    %c0_i32_0 = arith.constant 0 : i32
    %c0_i32_1 = arith.constant 0 : i32
    return %arg0, %c0_i32, %c0_i32_0 : i32, i32, i32
  }
  func.func @transform_10(%arg0: i32) -> (i32, i32, i32) {
    %c0_i32 = arith.constant 0 : i32
    %c0_i32_0 = arith.constant 0 : i32
    %c0_i32_1 = arith.constant 0 : i32
    return %arg0, %c0_i32, %c0_i32_0 : i32, i32, i32
  }
  func.func @transform_11(%arg0: i32) -> (i32, i32, i32) {
    %c0_i32 = arith.constant 0 : i32
    %c0_i32_0 = arith.constant 0 : i32
    %c0_i32_1 = arith.constant 0 : i32
    return %arg0, %c0_i32, %c0_i32_0 : i32, i32, i32
  }
  func.func @transform_12(%arg0: i32) -> (i32, i32, i32) {
    %c0_i32 = arith.constant 0 : i32
    %c0_i32_0 = arith.constant 0 : i32
    %c0_i32_1 = arith.constant 0 : i32
    return %arg0, %c0_i32, %c0_i32_0 : i32, i32, i32
  }
  func.func @transform_13(%arg0: i32) -> (i32, i32, i32) {
    %c0_i32 = arith.constant 0 : i32
    %c0_i32_0 = arith.constant 0 : i32
    %c0_i32_1 = arith.constant 0 : i32
    return %arg0, %c0_i32, %c0_i32_0 : i32, i32, i32
  }
  func.func @transform_14(%arg0: i32) -> (i32, i32, i32) {
    %c0_i32 = arith.constant 0 : i32
    %c0_i32_0 = arith.constant 0 : i32
    %c0_i32_1 = arith.constant 0 : i32
    return %arg0, %c0_i32, %c0_i32_0 : i32, i32, i32
  }
  func.func @transform_15(%arg0: i32) -> (i32, i32, i32) {
    %c0_i32 = arith.constant 0 : i32
    %c0_i32_0 = arith.constant 0 : i32
    %c0_i32_1 = arith.constant 0 : i32
    return %arg0, %c0_i32, %c0_i32_0 : i32, i32, i32
  }
  func.func @transform_16(%arg0: i32) -> (i32, i32, i32) {
    %c0_i32 = arith.constant 0 : i32
    %c0_i32_0 = arith.constant 0 : i32
    %c0_i32_1 = arith.constant 0 : i32
    return %arg0, %c0_i32, %c0_i32_0 : i32, i32, i32
  }
}

</mosaic_0001>

<llo_original>
// kernel: ensemble_forward.1
$region0: #{ensemble_forward.1}
  #allocation0 [shape = 'u32[]', space=smem, size = 0x4, offset = 0x4, fixed_abs, tag = 'smem constant byte address 0x4 - core index']
  #allocation1 [shape = 'u32[144,128]{1,0:T(1,128)}', space=vmem, size = 0x12000, scoped, tag = 'internal scratch']
  %s0 = inlined_call_operand.vmem [shape: bf16[16,16], index: 0, kind: input, shape index: {}]
  %s1 = inlined_call_operand.vmem [shape: bf16[16,8], index: 1, kind: input, shape index: {}]
  %s2 = inlined_call_operand.vmem [shape: bf16[2,16], index: 2, kind: input, shape index: {}]
  %s3 = inlined_call_operand.vmem [shape: bf16[2,8], index: 3, kind: input, shape index: {}]
  %s4 = inlined_call_operand.vmem [shape: bf16[3,8,128], index: 4, kind: input, shape index: {}]
  %s5 = inlined_call_operand.hbm [shape: f32[3,1,128], index: 5, kind: input, shape index: {}]
  %s6 = inlined_call_operand.vmem [shape: bf16[3,128,128], index: 6, kind: input, shape index: {}]
  %s7 = inlined_call_operand.hbm [shape: f32[3,1,128], index: 7, kind: input, shape index: {}]
  %s8 = inlined_call_operand.vmem [shape: bf16[3,8,32], index: 8, kind: input, shape index: {}]
  %s9 = inlined_call_operand.hbm [shape: f32[3,1,32], index: 9, kind: input, shape index: {}]
  %s10 = inlined_call_operand.hbm [shape: bf16[3,128,128], index: 10, kind: input, shape index: {}]
  %s11 = inlined_call_operand.hbm [shape: bf16[3,128,128], index: 11, kind: input, shape index: {}]
  %s12 = inlined_call_operand.hbm [shape: bf16[3,32,128], index: 12, kind: input, shape index: {}]
  %s13 = inlined_call_operand.hbm [shape: f32[3,1,128], index: 13, kind: input, shape index: {}]
  %s14 = inlined_call_operand.vmem [shape: bf16[3,128,4], index: 14, kind: input, shape index: {}]
  %s15 = inlined_call_operand.hbm [shape: f32[3,1,4], index: 15, kind: input, shape index: {}]
  %s16 = inlined_call_operand.vmem [shape: f32[3,2,4], index: 16, kind: output, shape index: {}]
  %s17 = sld [smem:[#allocation0]]
  $region129: #{ensemble_forward.1} parent=0
    _
  %s19 = ssub.s32 1, %s17
  %s20 = scalar_select 0, %s19, %s17
  $region1: #{ensemble_forward.1} parent=0
    #allocation2 [shape = 'u8[1024]{0}', space=vmem, size = 0x400, scoped, tag = 'input window, operand 5']
    #allocation3 [shape = 's32[2]{0}', space=sflag, size = 0x8, scoped, tag = 'scoped memory for ensemble_forward.1']
    #allocation4 [shape = 'u8[1024]{0}', space=vmem, size = 0x400, scoped, tag = 'input window, operand 7']
    #allocation5 [shape = 's32[2]{0}', space=sflag, size = 0x8, scoped, tag = 'scoped memory for ensemble_forward.1']
    #allocation6 [shape = 'u8[1024]{0}', space=vmem, size = 0x400, scoped, tag = 'input window, operand 9']
    #allocation7 [shape = 'u8[65536]{0}', space=vmem, size = 0x10000, scoped, tag = 'input window, operand 10']
    #allocation8 [shape = 's32[2]{0}', space=sflag, size = 0x8, scoped, tag = 'scoped memory for ensemble_forward.1']
    #allocation9 [shape = 'u8[65536]{0}', space=vmem, size = 0x10000, scoped, tag = 'input window, operand 11']
    #allocation10 [shape = 'u8[16384]{0}', space=vmem, size = 0x4000, scoped, tag = 'input window, operand 12']
    #allocation11 [shape = 's32[2]{0}', space=sflag, size = 0x8, scoped, tag = 'scoped memory for ensemble_forward.1']
    #allocation12 [shape = 'u8[1024]{0}', space=vmem, size = 0x400, scoped, tag = 'input window, operand 13']
    #allocation13 [shape = 'u8[1024]{0}', space=vmem, size = 0x400, scoped, tag = 'input window, operand 15']
    #allocation14 [shape = 's32[2]{0}', space=sflag, size = 0x8, scoped, tag = 'scoped memory for ensemble_forward.1']
    %21 = vsyncpa [#allocation3], 0
    %s22 = scalar_lea.sflag [#allocation3], 1
    %23 = vsyncpa %s22, 0
    %24 = vsyncpa [#allocation5], 0
    %s25 = scalar_lea.sflag [#allocation5], 1
    %26 = vsyncpa %s25, 0
    %27 = vsyncpa [#allocation8], 0
    %s28 = scalar_lea.sflag [#allocation8], 1
    %29 = vsyncpa %s28, 0
    %30 = vsyncpa [#allocation11], 0
    %s31 = scalar_lea.sflag [#allocation11], 1
    %32 = vsyncpa %s31, 0
    %33 = vsyncpa [#allocation14], 0
    %s34 = scalar_lea.sflag [#allocation14], 1
    %35 = vsyncpa %s34, 0
    loop: start=0, step=1, limit=5
    $region2: #{ensemble_forward.1} parent=1 // loop_pre_header
      _
    $region3: #{ensemble_forward.1} parent=1 // loop_header
      %s37 = sphi 0, %s41
      %p38 = scmp.ge.s32.totalorder %s37, 5
      %s45 = sphi 0, %s45
      %s47 = sphi 0, %s45
      %s48 = sphi 0, %s47
      %s62 = sphi 0, %s48
      %s66 = sphi 0, %s66
      %s68 = sphi 0, %s66
      %s69 = sphi 0, %s68
      %s83 = sphi 0, %s69
      %s87 = sphi 0, %s87
      %s89 = sphi 0, %s87
      %s90 = sphi 0, %s89
      %s104 = sphi 0, %s90
      %s108 = sphi 0, %s108
      %s110 = sphi 0, %s108
      %s111 = sphi 0, %s110
      %s125 = sphi 0, %s111
      %s131 = sphi 0, %s133
      %s134 = sphi 0, %s131
      %s135 = sphi 0, %s134
      %s151 = sphi 0, %s135
      %s157 = sphi 0, %s159
      %s160 = sphi 0, %s157
      %s161 = sphi 0, %s160
      %s177 = sphi 0, %s161
      %s183 = sphi 0, %s185
      %s186 = sphi 0, %s183
      %s187 = sphi 0, %s186
      %s203 = sphi 0, %s187
      %s209 = sphi 0, %s211
      %s212 = sphi 0, %s209
      %s213 = sphi 0, %s212
      %s229 = sphi 0, %s213
      %s235 = sphi 0, %s237
      %s238 = sphi 0, %s235
      %s239 = sphi 0, %s238
      %s255 = sphi 0, %s239
      %s261 = sphi 0, %s263
      %s264 = sphi 0, %s261
      %s265 = sphi 0, %s264
      %s281 = sphi 0, %s265
      %s287 = sphi 0, %s289
      %s290 = sphi 0, %s287
      %s291 = sphi 0, %s290
      %s307 = sphi 0, %s291
      %s313 = sphi 0, %s315
      %s316 = sphi 0, %s313
      %s317 = sphi 0, %s316
      %s333 = sphi 0, %s317
      %s339 = sphi 0, %s341
      %s342 = sphi 0, %s339
      %s343 = sphi 0, %s342
      %s359 = sphi 0, %s343
      %s365 = sphi 0, %s367
      %s368 = sphi 0, %s365
      %s369 = sphi 0, %s368
      %s385 = sphi 0, %s369
      %s391 = sphi 0, %s393
      %s394 = sphi 0, %s391
      %s395 = sphi 0, %s394
      %s411 = sphi 0, %s395
      %s417 = sphi 0, %s419
      %s420 = sphi 0, %s417
      %s421 = sphi 0, %s420
      %s437 = sphi 0, %s421
      %s443 = sphi 0, %s445
      %s446 = sphi 0, %s443
      %s447 = sphi 0, %s446
      %s463 = sphi 0, %s447
    $region4: #{ensemble_forward.1} parent=1 // loop_header_branch
      %40 = sbr.rel (%p38) target = $region8
    $region5: #{ensemble_forward.1} parent=1 // loop_body
      %s42 = ssub.s32 %s37, 1
      %s43 = ssub.s32 %s37, 2
      %s44 = sadd.s32 %s37, 1
      %s46 = sadd.s32 %s45, 1
      %p49 = scmp.eq.s32.totalorder %s37, 2
      %p50 = scmp.ne.s32.totalorder %s45, %s47
      %p51 = scmp.eq.s32.totalorder %s37, 0
      %p52 = por %p50, %p51
      %p53 = scmp.ne.s32.totalorder %s45, %s47
      %p54 = scmp.eq.s32.totalorder %s42, 2
      %p55 = por %p53, %p54
      %p56 = scmp.ne.s32.totalorder %s47, %s48
      %p57 = scmp.eq.s32.totalorder %s42, 0
      %p58 = por %p56, %p57
      %p59 = scmp.ne.s32.totalorder %s47, %s48
      %p60 = scmp.eq.s32.totalorder %s43, 2
      %p61 = por %p59, %p60
      %p63 = scmp.ne.s32.totalorder %s48, %s62
      %p64 = scmp.eq.s32.totalorder %s43, 0
      %p65 = por %p63, %p64
      %s67 = sadd.s32 %s66, 1
      %p70 = scmp.eq.s32.totalorder %s37, 2
      %p71 = scmp.ne.s32.totalorder %s66, %s68
      %p72 = scmp.eq.s32.totalorder %s37, 0
      %p73 = por %p71, %p72
      %p74 = scmp.ne.s32.totalorder %s66, %s68
      %p75 = scmp.eq.s32.totalorder %s42, 2
      %p76 = por %p74, %p75
      %p77 = scmp.ne.s32.totalorder %s68, %s69
      %p78 = scmp.eq.s32.totalorder %s42, 0
      %p79 = por %p77, %p78
      %p80 = scmp.ne.s32.totalorder %s68, %s69
      %p81 = scmp.eq.s32.totalorder %s43, 2
      %p82 = por %p80, %p81
      %p84 = scmp.ne.s32.totalorder %s69, %s83
      %p85 = scmp.eq.s32.totalorder %s43, 0
      %p86 = por %p84, %p85
      %s88 = sadd.s32 %s87, 1
      %p91 = scmp.eq.s32.totalorder %s37, 2
      %p92 = scmp.ne.s32.totalorder %s87, %s89
      %p93 = scmp.eq.s32.totalorder %s37, 0
      %p94 = por %p92, %p93
      %p95 = scmp.ne.s32.totalorder %s87, %s89
      %p96 = scmp.eq.s32.totalorder %s42, 2
      %p97 = por %p95, %p96
      %p98 = scmp.ne.s32.totalorder %s89, %s90
      %p99 = scmp.eq.s32.totalorder %s42, 0
      %p100 = por %p98, %p99
      %p101 = scmp.ne.s32.totalorder %s89, %s90
      %p102 = scmp.eq.s32.totalorder %s43, 2
      %p103 = por %p101, %p102
      %p105 = scmp.ne.s32.totalorder %s90, %s104
      %p106 = scmp.eq.s32.totalorder %s43, 0
      %p107 = por %p105, %p106
      %s109 = sadd.s32 %s108, 1
      %p112 = scmp.eq.s32.totalorder %s37, 2
      %p113 = scmp.ne.s32.totalorder %s108, %s110
      %p114 = scmp.eq.s32.totalorder %s37, 0
      %p115 = por %p113, %p114
      %p116 = scmp.ne.s32.totalorder %s108, %s110
      %p117 = scmp.eq.s32.totalorder %s42, 2
      %p118 = por %p116, %p117
      %p119 = scmp.ne.s32.totalorder %s110, %s111
      %p120 = scmp.eq.s32.totalorder %s42, 0
      %p121 = por %p119, %p120
      %p122 = scmp.ne.s32.totalorder %s110, %s111
      %p123 = scmp.eq.s32.totalorder %s43, 2
      %p124 = por %p122, %p123
      %p126 = scmp.ne.s32.totalorder %s111, %s125
      %p127 = scmp.eq.s32.totalorder %s43, 0
      %p128 = por %p126, %p127
      %s129 = ssub.s32 %s37, %s44
      %p130 = scmp.eq.s32.totalorder %s129, 0
      %s132 = sadd.s32 %s131, 1
      %s133 = scalar_select %p130, %s131, %s132
      %p136 = pneg %p130
      %p137 = scmp.eq.s32.totalorder %s37, 2
      %p138 = por %p136, %p137
      %p139 = scmp.ne.s32.totalorder %s131, %s134
      %p140 = scmp.eq.s32.totalorder %s37, 0
      %p141 = por %p139, %p140
      %p142 = scmp.ne.s32.totalorder %s131, %s134
      %p143 = scmp.eq.s32.totalorder %s42, 2
      %p144 = por %p142, %p143
      %p145 = scmp.ne.s32.totalorder %s134, %s135
      %p146 = scmp.eq.s32.totalorder %s42, 0
      %p147 = por %p145, %p146
      %p148 = scmp.ne.s32.totalorder %s134, %s135
      %p149 = scmp.eq.s32.totalorder %s43, 2
      %p150 = por %p148, %p149
      %p152 = scmp.ne.s32.totalorder %s135, %s151
      %p153 = scmp.eq.s32.totalorder %s43, 0
      %p154 = por %p152, %p153
      %s155 = ssub.s32 %s37, %s44
      %p156 = scmp.eq.s32.totalorder %s155, 0
      %s158 = sadd.s32 %s157, 1
      %s159 = scalar_select %p156, %s157, %s158
      %p162 = pneg %p156
      %p163 = scmp.eq.s32.totalorder %s37, 2
      %p164 = por %p162, %p163
      %p165 = scmp.ne.s32.totalorder %s157, %s160
      %p166 = scmp.eq.s32.totalorder %s37, 0
      %p167 = por %p165, %p166
      %p168 = scmp.ne.s32.totalorder %s157, %s160
      %p169 = scmp.eq.s32.totalorder %s42, 2
      %p170 = por %p168, %p169
      %p171 = scmp.ne.s32.totalorder %s160, %s161
      %p172 = scmp.eq.s32.totalorder %s42, 0
      %p173 = por %p171, %p172
      %p174 = scmp.ne.s32.totalorder %s160, %s161
      %p175 = scmp.eq.s32.totalorder %s43, 2
      %p176 = por %p174, %p175
      %p178 = scmp.ne.s32.totalorder %s161, %s177
      %p179 = scmp.eq.s32.totalorder %s43, 0
      %p180 = por %p178, %p179
      %s181 = ssub.s32 %s37, %s44
      %p182 = scmp.eq.s32.totalorder %s181, 0
      %s184 = sadd.s32 %s183, 1
      %s185 = scalar_select %p182, %s183, %s184
      %p188 = pneg %p182
      %p189 = scmp.eq.s32.totalorder %s37, 2
      %p190 = por %p188, %p189
      %p191 = scmp.ne.s32.totalorder %s183, %s186
      %p192 = scmp.eq.s32.totalorder %s37, 0
      %p193 = por %p191, %p192
      %p194 = scmp.ne.s32.totalorder %s183, %s186
      %p195 = scmp.eq.s32.totalorder %s42, 2
      %p196 = por %p194, %p195
      %p197 = scmp.ne.s32.totalorder %s186, %s187
      %p198 = scmp.eq.s32.totalorder %s42, 0
      %p199 = por %p197, %p198
      %p200 = scmp.ne.s32.totalorder %s186, %s187
      %p201 = scmp.eq.s32.totalorder %s43, 2
      %p202 = por %p200, %p201
      %p204 = scmp.ne.s32.totalorder %s187, %s203
      %p205 = scmp.eq.s32.totalorder %s43, 0
      %p206 = por %p204, %p205
      %s207 = ssub.s32 %s37, %s44
      %p208 = scmp.eq.s32.totalorder %s207, 0
      %s210 = sadd.s32 %s209, 1
      %s211 = scalar_select %p208, %s209, %s210
      %p214 = pneg %p208
      %p215 = scmp.eq.s32.totalorder %s37, 2
      %p216 = por %p214, %p215
      %p217 = scmp.ne.s32.totalorder %s209, %s212
      %p218 = scmp.eq.s32.totalorder %s37, 0
      %p219 = por %p217, %p218
      %p220 = scmp.ne.s32.totalorder %s209, %s212
      %p221 = scmp.eq.s32.totalorder %s42, 2
      %p222 = por %p220, %p221
      %p223 = scmp.ne.s32.totalorder %s212, %s213
      %p224 = scmp.eq.s32.totalorder %s42, 0
      %p225 = por %p223, %p224
      %p226 = scmp.ne.s32.totalorder %s212, %s213
      %p227 = scmp.eq.s32.totalorder %s43, 2
      %p228 = por %p226, %p227
      %p230 = scmp.ne.s32.totalorder %s213, %s229
      %p231 = scmp.eq.s32.totalorder %s43, 0
      %p232 = por %p230, %p231
      %s233 = ssub.s32 %s37, %s44
      %p234 = scmp.eq.s32.totalorder %s233, 0
      %s236 = sadd.s32 %s235, 1
      %s237 = scalar_select %p234, %s235, %s236
      %p240 = pneg %p234
      %p241 = scmp.eq.s32.totalorder %s37, 2
      %p242 = por %p240, %p241
      %p243 = scmp.ne.s32.totalorder %s235, %s238
      %p244 = scmp.eq.s32.totalorder %s37, 0
      %p245 = por %p243, %p244
      %p246 = scmp.ne.s32.totalorder %s235, %s238
      %p247 = scmp.eq.s32.totalorder %s42, 2
      %p248 = por %p246, %p247
      %p249 = scmp.ne.s32.totalorder %s238, %s239
      %p250 = scmp.eq.s32.totalorder %s42, 0
      %p251 = por %p249, %p250
      %p252 = scmp.ne.s32.totalorder %s238, %s239
      %p253 = scmp.eq.s32.totalorder %s43, 2
      %p254 = por %p252, %p253
      %p256 = scmp.ne.s32.totalorder %s239, %s255
      %p257 = scmp.eq.s32.totalorder %s43, 0
      %p258 = por %p256, %p257
      %s259 = ssub.s32 %s37, %s44
      %p260 = scmp.eq.s32.totalorder %s259, 0
      %s262 = sadd.s32 %s261, 1
      %s263 = scalar_select %p260, %s261, %s262
      %p266 = pneg %p260
      %p267 = scmp.eq.s32.totalorder %s37, 2
      %p268 = por %p266, %p267
      %p269 = scmp.ne.s32.totalorder %s261, %s264
      %p270 = scmp.eq.s32.totalorder %s37, 0
      %p271 = por %p269, %p270
      %p272 = scmp.ne.s32.totalorder %s261, %s264
      %p273 = scmp.eq.s32.totalorder %s42, 2
      %p274 = por %p272, %p273
      %p275 = scmp.ne.s32.totalorder %s264, %s265
      %p276 = scmp.eq.s32.totalorder %s42, 0
      %p277 = por %p275, %p276
      %p278 = scmp.ne.s32.totalorder %s264, %s265
      %p279 = scmp.eq.s32.totalorder %s43, 2
      %p280 = por %p278, %p279
      %p282 = scmp.ne.s32.totalorder %s265, %s281
      %p283 = scmp.eq.s32.totalorder %s43, 0
      %p284 = por %p282, %p283
      %s285 = ssub.s32 %s37, %s44
      %p286 = scmp.eq.s32.totalorder %s285, 0
      %s288 = sadd.s32 %s287, 1
      %s289 = scalar_select %p286, %s287, %s288
      %p292 = pneg %p286
      %p293 = scmp.eq.s32.totalorder %s37, 2
      %p294 = por %p292, %p293
      %p295 = scmp.ne.s32.totalorder %s287, %s290
      %p296 = scmp.eq.s32.totalorder %s37, 0
      %p297 = por %p295, %p296
      %p298 = scmp.ne.s32.totalorder %s287, %s290
      %p299 = scmp.eq.s32.totalorder %s42, 2
      %p300 = por %p298, %p299
      %p301 = scmp.ne.s32.totalorder %s290, %s291
      %p302 = scmp.eq.s32.totalorder %s42, 0
      %p303 = por %p301, %p302
      %p304 = scmp.ne.s32.totalorder %s290, %s291
      %p305 = scmp.eq.s32.totalorder %s43, 2
      %p306 = por %p304, %p305
      %p308 = scmp.ne.s32.totalorder %s291, %s307
      %p309 = scmp.eq.s32.totalorder %s43, 0
      %p310 = por %p308, %p309
      %s311 = ssub.s32 %s37, %s44
      %p312 = scmp.eq.s32.totalorder %s311, 0
      %s314 = sadd.s32 %s313, 1
      %s315 = scalar_select %p312, %s313, %s314
      %p318 = pneg %p312
      %p319 = scmp.eq.s32.totalorder %s37, 2
      %p320 = por %p318, %p319
      %p321 = scmp.ne.s32.totalorder %s313, %s316
      %p322 = scmp.eq.s32.totalorder %s37, 0
      %p323 = por %p321, %p322
      %p324 = scmp.ne.s32.totalorder %s313, %s316
      %p325 = scmp.eq.s32.totalorder %s42, 2
      %p326 = por %p324, %p325
      %p327 = scmp.ne.s32.totalorder %s316, %s317
      %p328 = scmp.eq.s32.totalorder %s42, 0
      %p329 = por %p327, %p328
      %p330 = scmp.ne.s32.totalorder %s316, %s317
      %p331 = scmp.eq.s32.totalorder %s43, 2
      %p332 = por %p330, %p331
      %p334 = scmp.ne.s32.totalorder %s317, %s333
      %p335 = scmp.eq.s32.totalorder %s43, 0
      %p336 = por %p334, %p335
      %s337 = ssub.s32 %s37, %s44
      %p338 = scmp.eq.s32.totalorder %s337, 0
      %s340 = sadd.s32 %s339, 1
      %s341 = scalar_select %p338, %s339, %s340
      %p344 = pneg %p338
      %p345 = scmp.eq.s32.totalorder %s37, 2
      %p346 = por %p344, %p345
      %p347 = scmp.ne.s32.totalorder %s339, %s342
      %p348 = scmp.eq.s32.totalorder %s37, 0
      %p349 = por %p347, %p348
      %p350 = scmp.ne.s32.totalorder %s339, %s342
      %p351 = scmp.eq.s32.totalorder %s42, 2
      %p352 = por %p350, %p351
      %p353 = scmp.ne.s32.totalorder %s342, %s343
      %p354 = scmp.eq.s32.totalorder %s42, 0
      %p355 = por %p353, %p354
      %p356 = scmp.ne.s32.totalorder %s342, %s343
      %p357 = scmp.eq.s32.totalorder %s43, 2
      %p358 = por %p356, %p357
      %p360 = scmp.ne.s32.totalorder %s343, %s359
      %p361 = scmp.eq.s32.totalorder %s43, 0
      %p362 = por %p360, %p361
      %s363 = ssub.s32 %s37, %s44
      %p364 = scmp.eq.s32.totalorder %s363, 0
      %s366 = sadd.s32 %s365, 1
      %s367 = scalar_select %p364, %s365, %s366
      %p370 = pneg %p364
      %p371 = scmp.eq.s32.totalorder %s37, 2
      %p372 = por %p370, %p371
      %p373 = scmp.ne.s32.totalorder %s365, %s368
      %p374 = scmp.eq.s32.totalorder %s37, 0
      %p375 = por %p373, %p374
      %p376 = scmp.ne.s32.totalorder %s365, %s368
      %p377 = scmp.eq.s32.totalorder %s42, 2
      %p378 = por %p376, %p377
      %p379 = scmp.ne.s32.totalorder %s368, %s369
      %p380 = scmp.eq.s32.totalorder %s42, 0
      %p381 = por %p379, %p380
      %p382 = scmp.ne.s32.totalorder %s368, %s369
      %p383 = scmp.eq.s32.totalorder %s43, 2
      %p384 = por %p382, %p383
      %p386 = scmp.ne.s32.totalorder %s369, %s385
      %p387 = scmp.eq.s32.totalorder %s43, 0
      %p388 = por %p386, %p387
      %s389 = ssub.s32 %s37, %s44
      %p390 = scmp.eq.s32.totalorder %s389, 0
      %s392 = sadd.s32 %s391, 1
      %s393 = scalar_select %p390, %s391, %s392
      %p396 = pneg %p390
      %p397 = scmp.eq.s32.totalorder %s37, 2
      %p398 = por %p396, %p397
      %p399 = scmp.ne.s32.totalorder %s391, %s394
      %p400 = scmp.eq.s32.totalorder %s37, 0
      %p401 = por %p399, %p400
      %p402 = scmp.ne.s32.totalorder %s391, %s394
      %p403 = scmp.eq.s32.totalorder %s42, 2
      %p404 = por %p402, %p403
      %p405 = scmp.ne.s32.totalorder %s394, %s395
      %p406 = scmp.eq.s32.totalorder %s42, 0
      %p407 = por %p405, %p406
      %p408 = scmp.ne.s32.totalorder %s394, %s395
      %p409 = scmp.eq.s32.totalorder %s43, 2
      %p410 = por %p408, %p409
      %p412 = scmp.ne.s32.totalorder %s395, %s411
      %p413 = scmp.eq.s32.totalorder %s43, 0
      %p414 = por %p412, %p413
      %s415 = ssub.s32 %s37, %s44
      %p416 = scmp.eq.s32.totalorder %s415, 0
      %s418 = sadd.s32 %s417, 1
      %s419 = scalar_select %p416, %s417, %s418
      %p422 = pneg %p416
      %p423 = scmp.eq.s32.totalorder %s37, 2
      %p424 = por %p422, %p423
      %p425 = scmp.ne.s32.totalorder %s417, %s420
      %p426 = scmp.eq.s32.totalorder %s37, 0
      %p427 = por %p425, %p426
      %p428 = scmp.ne.s32.totalorder %s417, %s420
      %p429 = scmp.eq.s32.totalorder %s42, 2
      %p430 = por %p428, %p429
      %p431 = scmp.ne.s32.totalorder %s420, %s421
      %p432 = scmp.eq.s32.totalorder %s42, 0
      %p433 = por %p431, %p432
      %p434 = scmp.ne.s32.totalorder %s420, %s421
      %p435 = scmp.eq.s32.totalorder %s43, 2
      %p436 = por %p434, %p435
      %p438 = scmp.ne.s32.totalorder %s421, %s437
      %p439 = scmp.eq.s32.totalorder %s43, 0
      %p440 = por %p438, %p439
      %s441 = ssub.s32 %s37, %s44
      %p442 = scmp.eq.s32.totalorder %s441, 0
      %s444 = sadd.s32 %s443, 1
      %s445 = scalar_select %p442, %s443, %s444
      %p448 = pneg %p442
      %p449 = scmp.eq.s32.totalorder %s37, 2
      %p450 = por %p448, %p449
      %p451 = scmp.ne.s32.totalorder %s443, %s446
      %p452 = scmp.eq.s32.totalorder %s37, 0
      %p453 = por %p451, %p452
      %p454 = scmp.ne.s32.totalorder %s443, %s446
      %p455 = scmp.eq.s32.totalorder %s42, 2
      %p456 = por %p454, %p455
      %p457 = scmp.ne.s32.totalorder %s446, %s447
      %p458 = scmp.eq.s32.totalorder %s42, 0
      %p459 = por %p457, %p458
      %p460 = scmp.ne.s32.totalorder %s446, %s447
      %p461 = scmp.eq.s32.totalorder %s43, 2
      %p462 = por %p460, %p461
      %p464 = scmp.ne.s32.totalorder %s447, %s463
      %p465 = scmp.eq.s32.totalorder %s43, 0
      %p466 = por %p464, %p465
      %p467 = scmp.le.s32.totalorder 1, %s37
      %p468 = scmp.lt.s32.totalorder %s37, 4
      %p469 = pnand %p467, %p468
      %p470 = pneg %p469
      // Predicated region
      $region9: #{ensemble_forward.1} parent=5 // pred_check
        _
      $region10: #{ensemble_forward.1} parent=5 // pred_check_branch
        %472 = sbr.rel (%p469) target = $region12
      $region11: #{ensemble_forward.1} parent=5 // pred_region
        %s473 = ssub.s32 %s37, 1
        // Predicated region
        $region13: #{ensemble_forward.1} parent=11 // pred_check
          %p474 = pneg %p58
        $region14: #{ensemble_forward.1} parent=11 // pred_check_branch
          %476 = sbr.rel (%p474) target = $region16
        $region15: #{ensemble_forward.1} parent=11 // pred_region
          _
        $region16: #{ensemble_forward.1} parent=11 // pred_fallthru
          _
        // Predicated region
        $region17: #{ensemble_forward.1} parent=11 // pred_check
          %p477 = pneg %p79
        $region18: #{ensemble_forward.1} parent=11 // pred_check_branch
          %479 = sbr.rel (%p477) target = $region20
        $region19: #{ensemble_forward.1} parent=11 // pred_region
          _
        $region20: #{ensemble_forward.1} parent=11 // pred_fallthru
          _
        // Predicated region
        $region21: #{ensemble_forward.1} parent=11 // pred_check
          %p480 = pneg %p100
        $region22: #{ensemble_forward.1} parent=11 // pred_check_branch
          %482 = sbr.rel (%p480) target = $region24
        $region23: #{ensemble_forward.1} parent=11 // pred_region
          _
        $region24: #{ensemble_forward.1} parent=11 // pred_fallthru
          _
        // Predicated region
        $region25: #{ensemble_forward.1} parent=11 // pred_check
          %p483 = pneg %p121
        $region26: #{ensemble_forward.1} parent=11 // pred_check_branch
          %485 = sbr.rel (%p483) target = $region28
        $region27: #{ensemble_forward.1} parent=11 // pred_region
          _
        $region28: #{ensemble_forward.1} parent=11 // pred_fallthru
          _
      $region12: #{ensemble_forward.1} parent=5 // pred_fallthru
        _
      %p486 = scmp.lt.s32.totalorder %s37, 3
      // Predicated region
      $region29: #{ensemble_forward.1} parent=5 // pred_check
        %p487 = pneg %p486
      $region30: #{ensemble_forward.1} parent=5 // pred_check_branch
        %489 = sbr.rel (%p487) target = $region32
      $region31: #{ensemble_forward.1} parent=5 // pred_region
        // Predicated region
        $region33: #{ensemble_forward.1} parent=31 // pred_check
          %p490 = pneg %p141
        $region34: #{ensemble_forward.1} parent=31 // pred_check_branch
          %492 = sbr.rel (%p490) target = $region36
        $region35: #{ensemble_forward.1} parent=31 // pred_region
          %p493 = scmp.lt.s32.totalorder %s37, 2
          %s494 = scalar_select %p493, %s37, 2
          %s495 = smul.addr %s494, 4
          %s496 = scalar_lea.vmem %s4, %s495
        $region36: #{ensemble_forward.1} parent=31 // pred_fallthru
          _
        // Predicated region
        $region37: #{ensemble_forward.1} parent=31 // pred_check
          %p497 = pneg %p167
        $region38: #{ensemble_forward.1} parent=31 // pred_check_branch
          %499 = sbr.rel (%p497) target = $region40
        $region39: #{ensemble_forward.1} parent=31 // pred_region
          %s500 = sand.u32 %s157, 1
          %s501 = scalar_lea.sflag [#allocation3], %s500
          %s502 = sand.u32 %s157, 1
          %s503 = scalar_lea.vmem [#allocation2], %s502
          %s505 = ssub.s32 16, 16
          %506 = vsyncadd %s501, %s505
          %s507 = smul.addr %s37, 16
          %s508 = scalar_lea.hbm %s5, %s507
          %s510 = sshll.u32 %s503, 4
          %s511 = int_to_ptr.vmem [resolvable:$true] %s510
          %513 = dma.hbm_to_vmem [thread:$0]  %s508, 16, %s511, %s501
        $region40: #{ensemble_forward.1} parent=31 // pred_fallthru
          _
        // Predicated region
        $region41: #{ensemble_forward.1} parent=31 // pred_check
          %p514 = pneg %p193
        $region42: #{ensemble_forward.1} parent=31 // pred_check_branch
          %516 = sbr.rel (%p514) target = $region44
        $region43: #{ensemble_forward.1} parent=31 // pred_region
          %p517 = scmp.lt.s32.totalorder %s37, 2
          %s518 = scalar_select %p517, %s37, 2
          %s519 = smul.addr %s518, 16
          %s520 = smul.addr %s519, 4
          %s521 = scalar_lea.vmem %s6, %s520
        $region44: #{ensemble_forward.1} parent=31 // pred_fallthru
          _
        // Predicated region
        $region45: #{ensemble_forward.1} parent=31 // pred_check
          %p522 = pneg %p219
        $region46: #{ensemble_forward.1} parent=31 // pred_check_branch
          %524 = sbr.rel (%p522) target = $region48
        $region47: #{ensemble_forward.1} parent=31 // pred_region
          %s525 = sand.u32 %s37, 1
          %s526 = scalar_lea.sflag [#allocation5], %s525
          %s527 = sand.u32 %s209, 1
          %s528 = scalar_lea.vmem [#allocation4], %s527
          %s530 = ssub.s32 16, 16
          %531 = vsyncadd %s526, %s530
          %s532 = smul.addr %s37, 16
          %s533 = scalar_lea.hbm %s7, %s532
          %s535 = sshll.u32 %s528, 4
          %s536 = int_to_ptr.vmem [resolvable:$true] %s535
          %538 = dma.hbm_to_vmem [thread:$0]  %s533, 16, %s536, %s526
        $region48: #{ensemble_forward.1} parent=31 // pred_fallthru
          _
        // Predicated region
        $region49: #{ensemble_forward.1} parent=31 // pred_check
          %p539 = pneg %p245
        $region50: #{ensemble_forward.1} parent=31 // pred_check_branch
          %541 = sbr.rel (%p539) target = $region52
        $region51: #{ensemble_forward.1} parent=31 // pred_region
          %p542 = scmp.lt.s32.totalorder %s37, 2
          %s543 = scalar_select %p542, %s37, 2
          %s544 = smul.addr %s543, 4
          %s545 = scalar_lea.vmem %s8, %s544
        $region52: #{ensemble_forward.1} parent=31 // pred_fallthru
          _
        // Predicated region
        $region53: #{ensemble_forward.1} parent=31 // pred_check
          %p546 = pneg %p271
        $region54: #{ensemble_forward.1} parent=31 // pred_check_branch
          %548 = sbr.rel (%p546) target = $region56
        $region55: #{ensemble_forward.1} parent=31 // pred_region
          %s549 = sand.u32 %s37, 1
          %s550 = scalar_lea.sflag [#allocation5], %s549
          %s551 = sand.u32 %s261, 1
          %s552 = scalar_lea.vmem [#allocation6], %s551
          %s554 = ssub.s32 16, 16
          %555 = vsyncadd %s550, %s554
          %s556 = smul.addr %s37, 16
          %s557 = scalar_lea.hbm %s9, %s556
          %s559 = sshll.u32 %s552, 4
          %s560 = int_to_ptr.vmem [resolvable:$true] %s559
          %562 = dma.hbm_to_vmem [thread:$0]  %s557, 16, %s560, %s550
        $region56: #{ensemble_forward.1} parent=31 // pred_fallthru
          _
        // Predicated region
        $region57: #{ensemble_forward.1} parent=31 // pred_check
          %p563 = pneg %p297
        $region58: #{ensemble_forward.1} parent=31 // pred_check_branch
          %565 = sbr.rel (%p563) target = $region60
        $region59: #{ensemble_forward.1} parent=31 // pred_region
          %s566 = sand.u32 %s37, 1
          %s567 = scalar_lea.sflag [#allocation8], %s566
          %s568 = sand.u32 %s287, 1
          %s569 = smul.addr %s568, 64
          %s570 = scalar_lea.vmem [#allocation7], %s569
          %s572 = ssub.s32 1024, 1024
          %573 = vsyncadd %s567, %s572
          %s574 = smul.addr %s37, 16
          %s575 = smul.addr %s574, 64
          %s576 = scalar_lea.hbm %s10, %s575
          %s577 = sshll.u32 %s570, 4
          %s578 = int_to_ptr.vmem [resolvable:$true] %s577
          %583 = dma.hbm_to_vmem [thread:$0]  %s576, 1024, %s578, %s567, 64, 64, 4
        $region60: #{ensemble_forward.1} parent=31 // pred_fallthru
          _
        // Predicated region
        $region61: #{ensemble_forward.1} parent=31 // pred_check
          %p584 = pneg %p323
        $region62: #{ensemble_forward.1} parent=31 // pred_check_branch
          %586 = sbr.rel (%p584) target = $region64
        $region63: #{ensemble_forward.1} parent=31 // pred_region
          %s587 = sand.u32 %s37, 1
          %s588 = scalar_lea.sflag [#allocation8], %s587
          %s589 = sand.u32 %s313, 1
          %s590 = smul.addr %s589, 64
          %s591 = scalar_lea.vmem [#allocation9], %s590
          %s593 = ssub.s32 1024, 1024
          %594 = vsyncadd %s588, %s593
          %s595 = smul.addr %s37, 16
          %s596 = smul.addr %s595, 64
          %s597 = scalar_lea.hbm %s11, %s596
          %s598 = sshll.u32 %s591, 4
          %s599 = int_to_ptr.vmem [resolvable:$true] %s598
          %604 = dma.hbm_to_vmem [thread:$0]  %s597, 1024, %s599, %s588, 64, 64, 4
        $region64: #{ensemble_forward.1} parent=31 // pred_fallthru
          _
        // Predicated region
        $region65: #{ensemble_forward.1} parent=31 // pred_check
          %p605 = pneg %p349
        $region66: #{ensemble_forward.1} parent=31 // pred_check_branch
          %607 = sbr.rel (%p605) target = $region68
        $region67: #{ensemble_forward.1} parent=31 // pred_region
          %s608 = sand.u32 %s37, 1
          %s609 = scalar_lea.sflag [#allocation11], %s608
          %s610 = sand.u32 %s339, 1
          %s611 = smul.addr %s610, 16
          %s612 = scalar_lea.vmem [#allocation10], %s611
          %s614 = ssub.s32 256, 256
          %615 = vsyncadd %s609, %s614
          %s616 = smul.addr %s37, 4
          %s617 = smul.addr %s616, 64
          %s618 = scalar_lea.hbm %s12, %s617
          %s619 = sshll.u32 %s612, 4
          %s620 = int_to_ptr.vmem [resolvable:$true] %s619
          %625 = dma.hbm_to_vmem [thread:$0]  %s618, 256, %s620, %s609, 64, 64, 4
        $region68: #{ensemble_forward.1} parent=31 // pred_fallthru
          _
        // Predicated region
        $region69: #{ensemble_forward.1} parent=31 // pred_check
          %p626 = pneg %p375
        $region70: #{ensemble_forward.1} parent=31 // pred_check_branch
          %628 = sbr.rel (%p626) target = $region72
        $region71: #{ensemble_forward.1} parent=31 // pred_region
          %s629 = sand.u32 %s37, 1
          %s630 = scalar_lea.sflag [#allocation11], %s629
          %s631 = sand.u32 %s365, 1
          %s632 = scalar_lea.vmem [#allocation12], %s631
          %s634 = ssub.s32 16, 16
          %635 = vsyncadd %s630, %s634
          %s636 = smul.addr %s37, 16
          %s637 = scalar_lea.hbm %s13, %s636
          %s639 = sshll.u32 %s632, 4
          %s640 = int_to_ptr.vmem [resolvable:$true] %s639
          %642 = dma.hbm_to_vmem [thread:$0]  %s637, 16, %s640, %s630
        $region72: #{ensemble_forward.1} parent=31 // pred_fallthru
          _
        // Predicated region
        $region73: #{ensemble_forward.1} parent=31 // pred_check
          %p643 = pneg %p401
        $region74: #{ensemble_forward.1} parent=31 // pred_check_branch
          %645 = sbr.rel (%p643) target = $region76
        $region75: #{ensemble_forward.1} parent=31 // pred_region
          %p646 = scmp.lt.s32.totalorder %s37, 2
          %s647 = scalar_select %p646, %s37, 2
          %s648 = smul.addr %s647, 16
          %s649 = smul.addr %s648, 4
          %s650 = scalar_lea.vmem %s14, %s649
        $region76: #{ensemble_forward.1} parent=31 // pred_fallthru
          _
        // Predicated region
        $region77: #{ensemble_forward.1} parent=31 // pred_check
          %p651 = pneg %p427
        $region78: #{ensemble_forward.1} parent=31 // pred_check_branch
          %653 = sbr.rel (%p651) target = $region80
        $region79: #{ensemble_forward.1} parent=31 // pred_region
          %s654 = sand.u32 %s417, 1
          %s655 = scalar_lea.sflag [#allocation14], %s654
          %s656 = sand.u32 %s417, 1
          %s657 = scalar_lea.vmem [#allocation13], %s656
          %s659 = ssub.s32 16, 16
          %660 = vsyncadd %s655, %s659
          %s661 = smul.addr %s37, 16
          %s662 = scalar_lea.hbm %s15, %s661
          %s664 = sshll.u32 %s657, 4
          %s665 = int_to_ptr.vmem [resolvable:$true] %s664
          %667 = dma.hbm_to_vmem [thread:$0]  %s662, 16, %s665, %s655
        $region80: #{ensemble_forward.1} parent=31 // pred_fallthru
          _
      $region32: #{ensemble_forward.1} parent=5 // pred_fallthru
        _
      %p668 = scmp.le.s32.totalorder 1, %s37
      %p669 = scmp.lt.s32.totalorder %s37, 4
      %p670 = pnand %p668, %p669
      %p671 = pneg %p670
      // Predicated region
      $region81: #{ensemble_forward.1} parent=5 // pred_check
        _
      $region82: #{ensemble_forward.1} parent=5 // pred_check_branch
        %673 = sbr.rel (%p670) target = $region84
      $region83: #{ensemble_forward.1} parent=5 // pred_region
        %s674 = ssub.s32 %s37, 1
        %s675 = sand.u32 %s160, 1
        %s676 = scalar_lea.sflag [#allocation3], %s675
        %s677 = sand.u32 %s160, 1
        %s678 = scalar_lea.vmem [#allocation2], %s677
        // Predicated region
        $region85: #{ensemble_forward.1} parent=83 // pred_check
          %p679 = pneg %p173
        $region86: #{ensemble_forward.1} parent=83 // pred_check_branch
          %681 = sbr.rel (%p679) target = $region88
        $region87: #{ensemble_forward.1} parent=83 // pred_region
          %682 = dma.done %s676, 16
        $region88: #{ensemble_forward.1} parent=83 // pred_fallthru
          _
        %s683 = sand.u32 %s42, 1
        %s684 = scalar_lea.sflag [#allocation5], %s683
        %s685 = sand.u32 %s212, 1
        %s686 = scalar_lea.vmem [#allocation4], %s685
        // Predicated region
        $region89: #{ensemble_forward.1} parent=83 // pred_check
          %p687 = pneg %p225
        $region90: #{ensemble_forward.1} parent=83 // pred_check_branch
          %689 = sbr.rel (%p687) target = $region92
        $region91: #{ensemble_forward.1} parent=83 // pred_region
          %690 = dma.done %s684, 16
        $region92: #{ensemble_forward.1} parent=83 // pred_fallthru
          _
        %s691 = sand.u32 %s42, 1
        %s692 = scalar_lea.sflag [#allocation5], %s691
        %s693 = sand.u32 %s264, 1
        %s694 = scalar_lea.vmem [#allocation6], %s693
        // Predicated region
        $region93: #{ensemble_forward.1} parent=83 // pred_check
          %p695 = pneg %p277
        $region94: #{ensemble_forward.1} parent=83 // pred_check_branch
          %697 = sbr.rel (%p695) target = $region96
        $region95: #{ensemble_forward.1} parent=83 // pred_region
          %698 = dma.done %s692, 16
        $region96: #{ensemble_forward.1} parent=83 // pred_fallthru
          _
        %s699 = sand.u32 %s42, 1
        %s700 = scalar_lea.sflag [#allocation8], %s699
        %s701 = sand.u32 %s290, 1
        %s702 = smul.addr %s701, 64
        %s703 = scalar_lea.vmem [#allocation7], %s702
        // Predicated region
        $region97: #{ensemble_forward.1} parent=83 // pred_check
          %p704 = pneg %p303
        $region98: #{ensemble_forward.1} parent=83 // pred_check_branch
          %706 = sbr.rel (%p704) target = $region100
        $region99: #{ensemble_forward.1} parent=83 // pred_region
          %707 = dma.done %s700, 1024
        $region100: #{ensemble_forward.1} parent=83 // pred_fallthru
          _
        %s708 = sand.u32 %s42, 1
        %s709 = scalar_lea.sflag [#allocation8], %s708
        %s710 = sand.u32 %s316, 1
        %s711 = smul.addr %s710, 64
        %s712 = scalar_lea.vmem [#allocation9], %s711
        // Predicated region
        $region101: #{ensemble_forward.1} parent=83 // pred_check
          %p713 = pneg %p329
        $region102: #{ensemble_forward.1} parent=83 // pred_check_branch
          %715 = sbr.rel (%p713) target = $region104
        $region103: #{ensemble_forward.1} parent=83 // pred_region
          %716 = dma.done %s709, 1024
        $region104: #{ensemble_forward.1} parent=83 // pred_fallthru
          _
        %s717 = sand.u32 %s42, 1
        %s718 = scalar_lea.sflag [#allocation11], %s717
        %s719 = sand.u32 %s342, 1
        %s720 = smul.addr %s719, 16
        %s721 = scalar_lea.vmem [#allocation10], %s720
        // Predicated region
        $region105: #{ensemble_forward.1} parent=83 // pred_check
          %p722 = pneg %p355
        $region106: #{ensemble_forward.1} parent=83 // pred_check_branch
          %724 = sbr.rel (%p722) target = $region108
        $region107: #{ensemble_forward.1} parent=83 // pred_region
          %725 = dma.done %s718, 256
        $region108: #{ensemble_forward.1} parent=83 // pred_fallthru
          _
        %s726 = sand.u32 %s42, 1
        %s727 = scalar_lea.sflag [#allocation11], %s726
        %s728 = sand.u32 %s368, 1
        %s729 = scalar_lea.vmem [#allocation12], %s728
        // Predicated region
        $region109: #{ensemble_forward.1} parent=83 // pred_check
          %p730 = pneg %p381
        $region110: #{ensemble_forward.1} parent=83 // pred_check_branch
          %732 = sbr.rel (%p730) target = $region112
        $region111: #{ensemble_forward.1} parent=83 // pred_region
          %733 = dma.done %s727, 16
        $region112: #{ensemble_forward.1} parent=83 // pred_fallthru
          _
        %s734 = sand.u32 %s420, 1
        %s735 = scalar_lea.sflag [#allocation14], %s734
        %s736 = sand.u32 %s420, 1
        %s737 = scalar_lea.vmem [#allocation13], %s736
        // Predicated region
        $region113: #{ensemble_forward.1} parent=83 // pred_check
          %p738 = pneg %p433
        $region114: #{ensemble_forward.1} parent=83 // pred_check_branch
          %740 = sbr.rel (%p738) target = $region116
        $region115: #{ensemble_forward.1} parent=83 // pred_region
          %741 = dma.done %s735, 16
        $region116: #{ensemble_forward.1} parent=83 // pred_fallthru
          _
        %p742 = pneg %p58
        %p743 = pneg %p55
        %p744 = pneg %p79
        %p745 = pneg %p76
        %p746 = pneg %p100
        %p747 = pneg %p97
        %p748 = pneg %p121
        %p749 = pneg %p118
        %p750 = scmp.lt.s32.totalorder %s42, 2
        %s751 = scalar_select %p750, %s42, 2
        %s752 = smul.addr %s751, 4
        %s753 = scalar_lea.vmem %s4, %s752
        %p754 = pneg %p147
        %p755 = pneg %p144
        %s756 = sand.u32 %s160, 1
        %s757 = scalar_lea.sflag [#allocation3], %s756
        %s758 = sand.u32 %s160, 1
        %s759 = scalar_lea.vmem [#allocation2], %s758
        %p760 = pneg %p173
        %p761 = pneg %p170
        %p762 = scmp.lt.s32.totalorder %s42, 2
        %s763 = scalar_select %p762, %s42, 2
        %s764 = smul.addr %s763, 16
        %s765 = smul.addr %s764, 4
        %s766 = scalar_lea.vmem %s6, %s765
        %p767 = pneg %p199
        %p768 = pneg %p196
        %s769 = sand.u32 %s42, 1
        %s770 = scalar_lea.sflag [#allocation5], %s769
        %s771 = sand.u32 %s212, 1
        %s772 = scalar_lea.vmem [#allocation4], %s771
        %p773 = pneg %p225
        %p774 = pneg %p222
        %p775 = scmp.lt.s32.totalorder %s42, 2
        %s776 = scalar_select %p775, %s42, 2
        %s777 = smul.addr %s776, 4
        %s778 = scalar_lea.vmem %s8, %s777
        %p779 = pneg %p251
        %p780 = pneg %p248
        %s781 = sand.u32 %s42, 1
        %s782 = scalar_lea.sflag [#allocation5], %s781
        %s783 = sand.u32 %s264, 1
        %s784 = scalar_lea.vmem [#allocation6], %s783
        %p785 = pneg %p277
        %p786 = pneg %p274
        %s787 = sand.u32 %s42, 1
        %s788 = scalar_lea.sflag [#allocation8], %s787
        %s789 = sand.u32 %s290, 1
        %s790 = smul.addr %s789, 64
        %s791 = scalar_lea.vmem [#allocation7], %s790
        %p792 = pneg %p303
        %p793 = pneg %p300
        %s794 = sand.u32 %s42, 1
        %s795 = scalar_lea.sflag [#allocation8], %s794
        %s796 = sand.u32 %s316, 1
        %s797 = smul.addr %s796, 64
        %s798 = scalar_lea.vmem [#allocation9], %s797
        %p799 = pneg %p329
        %p800 = pneg %p326
        %s801 = sand.u32 %s42, 1
        %s802 = scalar_lea.sflag [#allocation11], %s801
        %s803 = sand.u32 %s342, 1
        %s804 = smul.addr %s803, 16
        %s805 = scalar_lea.vmem [#allocation10], %s804
        %p806 = pneg %p355
        %p807 = pneg %p352
        %s808 = sand.u32 %s42, 1
        %s809 = scalar_lea.sflag [#allocation11], %s808
        %s810 = sand.u32 %s368, 1
        %s811 = scalar_lea.vmem [#allocation12], %s810
        %p812 = pneg %p381
        %p813 = pneg %p378
        %p814 = scmp.lt.s32.totalorder %s42, 2
        %s815 = scalar_select %p814, %s42, 2
        %s816 = smul.addr %s815, 16
        %s817 = smul.addr %s816, 4
        %s818 = scalar_lea.vmem %s14, %s817
        %p819 = pneg %p407
        %p820 = pneg %p404
        %s821 = sand.u32 %s420, 1
        %s822 = scalar_lea.sflag [#allocation14], %s821
        %s823 = sand.u32 %s420, 1
        %s824 = scalar_lea.vmem [#allocation13], %s823
        %p825 = pneg %p433
        %p826 = pneg %p430
        %p827 = pneg %p459
        %p828 = pneg %p456
        %p829 = scmp.lt.s32.totalorder %s42, 2
        %s830 = scalar_select %p829, %s42, 2
        %s831 = smul.addr %s830, 2
        %s832 = scalar_lea.vmem %s16, %s831
        %p833 = scmp.lt.s32.totalorder %s42, 2
        %s834 = scalar_select %p833, %s42, 2
        %s835 = smul.addr %s834, 4
        %s836 = scalar_lea.vmem %s4, %s835
        %p837 = scmp.lt.s32.totalorder %s42, 2
        %s838 = scalar_select %p837, %s42, 2
        %s839 = smul.addr %s838, 16
        %s840 = smul.addr %s839, 4
        %s841 = scalar_lea.vmem %s6, %s840
        %p842 = scmp.lt.s32.totalorder %s42, 2
        %s843 = scalar_select %p842, %s42, 2
        %s844 = smul.addr %s843, 4
        %s845 = scalar_lea.vmem %s8, %s844
        %p846 = scmp.lt.s32.totalorder %s42, 2
        %s847 = scalar_select %p846, %s42, 2
        %s848 = smul.addr %s847, 16
        %s849 = smul.addr %s848, 4
        %s850 = scalar_lea.vmem %s14, %s849
        %p851 = scmp.lt.s32.totalorder %s42, 2
        %s852 = scalar_select %p851, %s42, 2
        %s853 = smul.addr %s852, 2
        %s854 = scalar_lea.vmem %s16, %s853
        %v859 = vld [vmem:[%s0] sm:$0xf]
        %v860 = vld [vmem:[%s0 + $0x4] sm:$0xf]
        %v861 = vld [vmem:[%s1] sm:$0xf]
        %v862 = vld [vmem:[%s1 + $0x4] sm:$0xf]
        %v863 = vld [vmem:[%s836] sm:$0xf]
        %v866 = vunpack.c.l.b16 %v861
        %v867 = vunpack.c.l.b16 %v862
        %v868 = vpack.c.b16 %v867, %v866
        %vm869 = vcmask 64512
        %v871 = vsel %vm869, %v868, 0
        %vm873 = vcmask 1043456
        %v875 = vsel %vm873, %v863, 0
        %877 = vmatprep.subr.bf16.mxu0 0
        %878 = vmatpush1.bf16.msra.mxu0 0
        %879 = vmatprep.subr.bf16.mxu0 0
        %880 = vmatpush1.bf16.msra.mxu0 0
        %881 = vmatprep.subr.bf16.mxu0 0
        %882 = vmatpush1.bf16.msra.mxu0 0
        %883 = vmatprep.subr.bf16.mxu0 0
        %884 = vmatpush1.bf16.msra.mxu0 0
        %885 = vmatprep.subr.bf16.mxu0 0
        %886 = vmatpush1.bf16.msra.mxu0 0
        %887 = vmatprep.subr.bf16.mxu0 0
        %888 = vmatpush1.bf16.msra.mxu0 0
        %889 = vmatprep.subr.bf16.mxu0 0
        %890 = vmatpush1.bf16.msra.mxu0 0
        %891 = vmatprep.subr.bf16.mxu0 0
        %892 = vmatpush1.bf16.msra.mxu0 %v875
        %893 = vmatprep.subr.bf16.mxu0 0
        %894 = vmatpush2.bf16.msra.mxu0 0
        %895 = vmatprep.subr.bf16.mxu0 0
        %896 = vmatpush2.bf16.msra.mxu0 0
        %897 = vmatprep.subr.bf16.mxu0 0
        %898 = vmatpush2.bf16.msra.mxu0 0
        %899 = vmatprep.subr.bf16.mxu0 0
        %900 = vmatpush2.bf16.msra.mxu0 0
        %901 = vmatprep.subr.bf16.mxu0 0
        %902 = vmatpush2.bf16.msra.mxu0 0
        %903 = vmatprep.subr.bf16.mxu0 0
        %904 = vmatpush2.bf16.msra.mxu0 0
        %905 = vmatprep.subr.bf16.mxu0 0
        %906 = vmatpush2.bf16.msra.mxu0 0
        %907 = vmatprep.subr.bf16.mxu0 0
        %908 = vmatpush2.bf16.msra.mxu0 0
        %909 = vmatprep.mubr.bf16.mxu0 0
        %910 = vmatmul.mubr.bf16.gmra.mxu0 %v871
        %v911 = vpop.f32.mrf.mxu0
        %v912 = vadd.f32 0.0, %v911
        %v913 = vpop.f32.mrf.mxu0
        %v914 = vpop.f32.mrf.mxu0
        %v915 = vadd.f32 0.0, %v914
        %v916 = vpop.f32.mrf.mxu0
        %917 = vdwg.mxu0
        %v918 = vpack.c.bf16 %v915, %v912
        %v919 = vld [vmem:[%s678] sm:$0x1]
        %v921 = vlaneseq
        %v922 = vshrl.u32 %v921, 7
        %v923 = vsub.s32 0, %v922
        %v924 = vrot.slane %v919, %v923
        %v928 = vunpack.c.l.b16 %v859
        %v929 = vunpack.c.l.b16 %v860
        %v930 = vpack.c.b16 %v929, %v928
        %vm931 = vcmask 130048
        %v933 = vsel %vm931, %v930, 0
        %935 = vmatprep.subr.bf16.mxu0 0
        %936 = vmatpush1.bf16.msra.mxu0 0
        %937 = vmatprep.subr.bf16.mxu0 0
        %938 = vmatpush1.bf16.msra.mxu0 0
        %939 = vmatprep.subr.bf16.mxu0 0
        %940 = vmatpush1.bf16.msra.mxu0 0
        %941 = vmatprep.subr.bf16.mxu0 0
        %942 = vmatpush1.bf16.msra.mxu0 0
        %943 = vmatprep.subr.bf16.mxu0 0
        %944 = vmatpush1.bf16.msra.mxu0 0
        %945 = vmatprep.subr.bf16.mxu0 0
        %946 = vmatpush1.bf16.msra.mxu0 0
        %947 = vmatprep.subr.bf16.mxu0 0
        %948 = vmatpush1.bf16.msra.mxu0 0
        %949 = vmatprep.subr.bf16.mxu0 0
        %950 = vmatpush1.bf16.msra.mxu0 %v918
        %951 = vmatprep.subr.bf16.mxu0 0
        %952 = vmatpush2.bf16.msra.mxu0 0
        %953 = vmatprep.subr.bf16.mxu0 0
        %954 = vmatpush2.bf16.msra.mxu0 0
        %955 = vmatprep.subr.bf16.mxu0 0
        %956 = vmatpush2.bf16.msra.mxu0 0
        %957 = vmatprep.subr.bf16.mxu0 0
        %958 = vmatpush2.bf16.msra.mxu0 0
        %959 = vmatprep.subr.bf16.mxu0 0
        %960 = vmatpush2.bf16.msra.mxu0 0
        %961 = vmatprep.subr.bf16.mxu0 0
        %962 = vmatpush2.bf16.msra.mxu0 0
        %963 = vmatprep.subr.bf16.mxu0 0
        %964 = vmatpush2.bf16.msra.mxu0 0
        %965 = vmatprep.subr.bf16.mxu0 0
        %966 = vmatpush2.bf16.msra.mxu0 0
        %967 = vmatprep.mubr.bf16.mxu0 0
        %968 = vmatmul.mubr.bf16.gmra.mxu0 %v933
        %v969 = vpop.f32.mrf.mxu0
        %v970 = vadd.f32 %v924, %v969
        %v971 = vpop.f32.mrf.mxu0
        %v972 = vpop.f32.mrf.mxu0
        %v973 = vadd.f32 %v924, %v972
        %v974 = vpop.f32.mrf.mxu0
        %975 = vdwg.mxu0
        %v976 = vmax.f32 %v970, 0.0
        %v977 = vmax.f32 %v973, 0.0
        %v978 = vpack.c.bf16 %v977, %v976
        %v979 = vld [vmem:[%s841] sm:$0xf]
        %v980 = vld [vmem:[%s841 + $0x4] sm:$0xf]
        %v981 = vld [vmem:[%s841 + $0x8] sm:$0xf]
        %v982 = vld [vmem:[%s841 + $0xc] sm:$0xf]
        %v983 = vld [vmem:[%s841 + $0x10] sm:$0xf]
        %v984 = vld [vmem:[%s841 + $0x14] sm:$0xf]
        %v985 = vld [vmem:[%s841 + $0x18] sm:$0xf]
        %v986 = vld [vmem:[%s841 + $0x1c] sm:$0xf]
        %v987 = vld [vmem:[%s841 + $0x20] sm:$0xf]
        %v988 = vld [vmem:[%s841 + $0x24] sm:$0xf]
        %v989 = vld [vmem:[%s841 + $0x28] sm:$0xf]
        %v990 = vld [vmem:[%s841 + $0x2c] sm:$0xf]
        %v991 = vld [vmem:[%s841 + $0x30] sm:$0xf]
        %v992 = vld [vmem:[%s841 + $0x34] sm:$0xf]
        %v993 = vld [vmem:[%s841 + $0x38] sm:$0xf]
        %v994 = vld [vmem:[%s841 + $0x3c] sm:$0xf]
        %v1011 = vunpack.c.l.b16 %v979
        %v1012 = vunpack.c.l.b16 %v980
        %v1013 = vunpack.c.l.b16 %v981
        %v1014 = vunpack.c.l.b16 %v982
        %v1015 = vunpack.c.l.b16 %v983
        %v1016 = vunpack.c.l.b16 %v984
        %v1017 = vunpack.c.l.b16 %v985
        %v1018 = vunpack.c.l.b16 %v986
        %v1019 = vunpack.c.l.b16 %v987
        %v1020 = vunpack.c.l.b16 %v988
        %v1021 = vunpack.c.l.b16 %v989
        %v1022 = vunpack.c.l.b16 %v990
        %v1023 = vunpack.c.l.b16 %v991
        %v1024 = vunpack.c.l.b16 %v992
        %v1025 = vunpack.c.l.b16 %v993
        %v1026 = vunpack.c.l.b16 %v994
        %v1027 = vpack.c.b16 %v1012, %v1011
        %v1028 = vpack.c.b16 %v1014, %v1013
        %v1029 = vpack.c.b16 %v1016, %v1015
        %v1030 = vpack.c.b16 %v1018, %v1017
        %v1031 = vpack.c.b16 %v1020, %v1019
        %v1032 = vpack.c.b16 %v1022, %v1021
        %v1033 = vpack.c.b16 %v1024, %v1023
        %v1034 = vpack.c.b16 %v1026, %v1025
        %1043 = vmatprep.subr.bf16.mxu0 0
        %1044 = vmatpush1.bf16.msra.mxu0 %v1034
        %1045 = vmatprep.subr.bf16.mxu0 0
        %1046 = vmatpush1.bf16.msra.mxu0 %v1033
        %1047 = vmatprep.subr.bf16.mxu0 0
        %1048 = vmatpush1.bf16.msra.mxu0 %v1032
        %1049 = vmatprep.subr.bf16.mxu0 0
        %1050 = vmatpush1.bf16.msra.mxu0 %v1031
        %1051 = vmatprep.subr.bf16.mxu0 0
        %1052 = vmatpush1.bf16.msra.mxu0 %v1030
        %1053 = vmatprep.subr.bf16.mxu0 0
        %1054 = vmatpush1.bf16.msra.mxu0 %v1029
        %1055 = vmatprep.subr.bf16.mxu0 0
        %1056 = vmatpush1.bf16.msra.mxu0 %v1028
        %1057 = vmatprep.subr.bf16.mxu0 0
        %1058 = vmatpush1.bf16.msra.mxu0 %v1027
        %1059 = vmatprep.subr.bf16.mxu0 0
        %1060 = vmatpush2.bf16.msra.mxu0 0
        %1061 = vmatprep.subr.bf16.mxu0 0
        %1062 = vmatpush2.bf16.msra.mxu0 0
        %1063 = vmatprep.subr.bf16.mxu0 0
        %1064 = vmatpush2.bf16.msra.mxu0 0
        %1065 = vmatprep.subr.bf16.mxu0 0
        %1066 = vmatpush2.bf16.msra.mxu0 0
        %1067 = vmatprep.subr.bf16.mxu0 0
        %1068 = vmatpush2.bf16.msra.mxu0 0
        %1069 = vmatprep.subr.bf16.mxu0 0
        %1070 = vmatpush2.bf16.msra.mxu0 0
        %1071 = vmatprep.subr.bf16.mxu0 0
        %1072 = vmatpush2.bf16.msra.mxu0 0
        %1073 = vmatprep.subr.bf16.mxu0 0
        %1074 = vmatpush2.bf16.msra.mxu0 0
        %1075 = vmatprep.mubr.bf16.mxu0 0
        %1076 = vmatmul.mubr.bf16.gmra.mxu0 %v978
        %v1077 = vpop.f32.mrf.mxu0
        %v1078 = vadd.f32 0.0, %v1077
        %v1079 = vpop.f32.mrf.mxu0
        %v1080 = vpop.f32.mrf.mxu0
        %v1081 = vadd.f32 0.0, %v1080
        %v1082 = vpop.f32.mrf.mxu0
        %1083 = vdwg.mxu0
        %v1084 = vpack.c.bf16 %v1081, %v1078
        %v1085 = vld [vmem:[%s686] sm:$0x1]
        %v1087 = vlaneseq
        %v1088 = vshrl.u32 %v1087, 7
        %v1089 = vsub.s32 0, %v1088
        %v1090 = vrot.slane %v1085, %v1089
        %1092 = vmatprep.subr.bf16.mxu0 0
        %1093 = vmatpush1.bf16.msra.mxu0 0
        %1094 = vmatprep.subr.bf16.mxu0 0
        %1095 = vmatpush1.bf16.msra.mxu0 0
        %1096 = vmatprep.subr.bf16.mxu0 0
        %1097 = vmatpush1.bf16.msra.mxu0 0
        %1098 = vmatprep.subr.bf16.mxu0 0
        %1099 = vmatpush1.bf16.msra.mxu0 0
        %1100 = vmatprep.subr.bf16.mxu0 0
        %1101 = vmatpush1.bf16.msra.mxu0 0
        %1102 = vmatprep.subr.bf16.mxu0 0
        %1103 = vmatpush1.bf16.msra.mxu0 0
        %1104 = vmatprep.subr.bf16.mxu0 0
        %1105 = vmatpush1.bf16.msra.mxu0 0
        %1106 = vmatprep.subr.bf16.mxu0 0
        %1107 = vmatpush1.bf16.msra.mxu0 %v1084
        %1108 = vmatprep.subr.bf16.mxu0 0
        %1109 = vmatpush2.bf16.msra.mxu0 0
        %1110 = vmatprep.subr.bf16.mxu0 0
        %1111 = vmatpush2.bf16.msra.mxu0 0
        %1112 = vmatprep.subr.bf16.mxu0 0
        %1113 = vmatpush2.bf16.msra.mxu0 0
        %1114 = vmatprep.subr.bf16.mxu0 0
        %1115 = vmatpush2.bf16.msra.mxu0 0
        %1116 = vmatprep.subr.bf16.mxu0 0
        %1117 = vmatpush2.bf16.msra.mxu0 0
        %1118 = vmatprep.subr.bf16.mxu0 0
        %1119 = vmatpush2.bf16.msra.mxu0 0
        %1120 = vmatprep.subr.bf16.mxu0 0
        %1121 = vmatpush2.bf16.msra.mxu0 0
        %1122 = vmatprep.subr.bf16.mxu0 0
        %1123 = vmatpush2.bf16.msra.mxu0 0
        %1124 = vmatprep.mubr.bf16.mxu0 0
        %1125 = vmatmul.mubr.bf16.gmra.mxu0 %v933
        %v1126 = vpop.f32.mrf.mxu0
        %v1127 = vadd.f32 %v1090, %v1126
        %v1128 = vpop.f32.mrf.mxu0
        %v1129 = vpop.f32.mrf.mxu0
        %v1130 = vadd.f32 %v1090, %v1129
        %v1131 = vpop.f32.mrf.mxu0
        %1132 = vdwg.mxu0
        %v1133 = vmax.f32 %v1127, 0.0
        %v1134 = vmax.f32 %v1130, 0.0
        %v1135 = vadd.f32 %v1133, %v976
        %v1136 = vadd.f32 %v1134, %v977
        %v1137 = vpack.c.bf16 %v1136, %v1135
        %v1138 = vld [vmem:[%s2] sm:$0x1]
        %v1140 = vsel %vm931, %v1138, 0
        %1142 = vmatprep.subr.bf16.mxu0 0
        %1143 = vmatpush1.bf16.msra.mxu0 0
        %1144 = vmatprep.subr.bf16.mxu0 0
        %1145 = vmatpush1.bf16.msra.mxu0 0
        %1146 = vmatprep.subr.bf16.mxu0 0
        %1147 = vmatpush1.bf16.msra.mxu0 0
        %1148 = vmatprep.subr.bf16.mxu0 0
        %1149 = vmatpush1.bf16.msra.mxu0 0
        %1150 = vmatprep.subr.bf16.mxu0 0
        %1151 = vmatpush1.bf16.msra.mxu0 0
        %1152 = vmatprep.subr.bf16.mxu0 0
        %1153 = vmatpush1.bf16.msra.mxu0 0
        %1154 = vmatprep.subr.bf16.mxu0 0
        %1155 = vmatpush1.bf16.msra.mxu0 0
        %1156 = vmatprep.subr.bf16.mxu0 0
        %1157 = vmatpush1.bf16.msra.mxu0 %v1137
        %1158 = vmatprep.subr.bf16.mxu0 0
        %1159 = vmatpush2.bf16.msra.mxu0 0
        %1160 = vmatprep.subr.bf16.mxu0 0
        %1161 = vmatpush2.bf16.msra.mxu0 0
        %1162 = vmatprep.subr.bf16.mxu0 0
        %1163 = vmatpush2.bf16.msra.mxu0 0
        %1164 = vmatprep.subr.bf16.mxu0 0
        %1165 = vmatpush2.bf16.msra.mxu0 0
        %1166 = vmatprep.subr.bf16.mxu0 0
        %1167 = vmatpush2.bf16.msra.mxu0 0
        %1168 = vmatprep.subr.bf16.mxu0 0
        %1169 = vmatpush2.bf16.msra.mxu0 0
        %1170 = vmatprep.subr.bf16.mxu0 0
        %1171 = vmatpush2.bf16.msra.mxu0 0
        %1172 = vmatprep.subr.bf16.mxu0 0
        %1173 = vmatpush2.bf16.msra.mxu0 0
        %1174 = vmatprep.mubr.bf16.mxu0 0
        %1175 = vmatmul.mubr.bf16.gmra.mxu0 %v1140
        %v1176 = vpop.f32.mrf.mxu0
        %v1177 = vadd.f32 0.0, %v1176
        %v1178 = vpop.f32.mrf.mxu0
        %v1179 = vpop.f32.mrf.mxu0
        %v1180 = vpop.f32.mrf.mxu0
        %1181 = vdwg.mxu0
        %v1182 = vpack.i.b16 %v1138, %v1138
        %v1184 = vlaneseq
        %v1185 = vshrl.u32 %v1184, 7
        %v1186 = vsub.s32 0, %v1185
        %v1187 = vrot.slane %v1182, %v1186
        %1189 = vbcast.lane.c.b16.xlu0 %v1187, 256
        %v1190 = vpop.permute.xlu0 %1189
        %v1191 = vshrl.u32 %v1138, 16
        %v1192 = vpack.i.b16 %v1191, %v1191
        %v1194 = vlaneseq
        %v1195 = vshrl.u32 %v1194, 7
        %v1196 = vsub.s32 0, %v1195
        %v1197 = vrot.slane %v1192, %v1196
        %1199 = vbcast.lane.c.b16.xlu0 %v1197, 256
        %v1200 = vpop.permute.xlu0 %1199
        %vm1201 = vcmp.gt.bf16.partialorder %v1190, 1056980736
        %vm1202 = vcmp.gt.bf16.partialorder %v1200, 1056980736
        %v1203 = vsel %vm1201, 65537, 0
        %v1204 = vsel %vm1202, 65537, 0
        %v1206 = vunpack.c.l.s4 839922192
        %v1207 = vunpack.c.0.s8 %v1206
        %v1208 = vlaneseq
        %v1209 = vshrl.u32 %v1208, 7
        %v1210 = vsub.s32 %v1207, %v1209
        %v1211 = vrot.slane %v1203, %v1210
        %v1213 = vunpack.c.l.s4 1985246804
        %v1214 = vunpack.c.0.s8 %v1213
        %v1215 = vlaneseq
        %v1216 = vshrl.u32 %v1215, 7
        %v1217 = vsub.s32 %v1214, %v1216
        %v1218 = vrot.slane %v1203, %v1217
        %v1220 = vunpack.c.l.s4 839922192
        %v1221 = vunpack.c.0.s8 %v1220
        %v1222 = vlaneseq
        %v1223 = vshrl.u32 %v1222, 7
        %v1224 = vsub.s32 %v1221, %v1223
        %v1225 = vrot.slane %v1204, %v1224
        %v1227 = vunpack.c.l.s4 1985246804
        %v1228 = vunpack.c.0.s8 %v1227
        %v1229 = vlaneseq
        %v1230 = vshrl.u32 %v1229, 7
        %v1231 = vsub.s32 %v1228, %v1230
        %v1232 = vrot.slane %v1204, %v1231
        %vm1233 = vcmp.ne.s16.totalorder %v1211, 0
        %vm1234 = vcmp.ne.s16.totalorder %v1218, 0
        %vm1235 = vcmp.ne.s16.totalorder %v1225, 0
        %vm1236 = vcmp.ne.s16.totalorder %v1232, 0
        %v1237 = vsel %vm1233, 65537, 0
        %v1238 = vsel %vm1234, 65537, 0
        %v1239 = vsel %vm1235, 65537, 0
        %v1240 = vsel %vm1236, 65537, 0
        %v1241 = vunpack.c.l.b16 %v1237
        %v1242 = vunpack.c.l.b16 %v1238
        %v1243 = vunpack.c.l.b16 %v1239
        %v1244 = vunpack.c.l.b16 %v1240
        %vm1245 = vcmp.ne.s32.totalorder %v1241, 0
        %vm1246 = vcmp.ne.s32.totalorder %v1242, 0
        %vm1247 = vcmp.ne.s32.totalorder %v1243, 0
        %vm1248 = vcmp.ne.s32.totalorder %v1244, 0
        %v1249 = vsel %vm1245, 1, 0
        %v1250 = vsel %vm1246, 1, 0
        %v1251 = vsel %vm1247, 1, 0
        %v1252 = vsel %vm1248, 1, 0
        %1253 = vset.pattern.permute.xlu0 0
        %1254 = vperm.xlu0 %1253, %v1249
        %v1255 = vpop.permute.xlu0 %1254
        %1256 = vset.pattern.permute.xlu0 0
        %1257 = vperm.xlu0 %1256, %v1250
        %v1258 = vpop.permute.xlu0 %1257
        %1259 = vset.pattern.permute.xlu0 0
        %1260 = vperm.xlu0 %1259, %v1251
        %v1261 = vpop.permute.xlu0 %1260
        %1262 = vset.pattern.permute.xlu0 0
        %1263 = vperm.xlu0 %1262, %v1252
        %v1264 = vpop.permute.xlu0 %1263
        %vm1265 = vcmp.eq.s32.totalorder %v1255, 1
        %vm1266 = vcmp.eq.s32.totalorder %v1258, 1
        %vm1267 = vcmp.eq.s32.totalorder %v1261, 1
        %vm1268 = vcmp.eq.s32.totalorder %v1264, 1
        %v1269 = vsel %vm1265, %v1135, -1e+30
        %v1270 = vsel %vm1266, %v1136, -1e+30
        %v1271 = vsel %vm1267, %v1135, -1e+30
        %v1272 = vsel %vm1268, %v1136, -1e+30
        %v1273 = vmax.f32 %v1269, %v1270
        %v1274 = vrot.slane %v1273, 4
        %v1275 = vmax.f32 %v1273, %v1274
        %v1276 = vrot.slane %v1275, 2
        %v1277 = vmax.f32 %v1275, %v1276
        %v1278 = vrot.slane %v1277, 1
        %v1279 = vmax.f32 %v1277, %v1278
        %v1280 = vmax.f32 %v1271, %v1272
        %v1281 = vrot.slane %v1280, 4
        %v1282 = vmax.f32 %v1280, %v1281
        %v1283 = vrot.slane %v1282, 2
        %v1284 = vmax.f32 %v1282, %v1283
        %v1285 = vrot.slane %v1284, 1
        %v1286 = vmax.f32 %v1284, %v1285
        %v1287 = vld [vmem:[%s3] sm:$0x1]
        %v1288 = vld [vmem:[%s845] sm:$0xf]
        %v1289 = vld [vmem:[%s694] sm:$0x1]
        %v1291 = vlaneseq
        %v1292 = vshrl.u32 %v1291, 7
        %v1293 = vsub.s32 0, %v1292
        %v1294 = vrot.slane %v1289, %v1293
        %v1297 = vsel %vm869, %v1287, 0
        %v1300 = vsel %vm873, %v1288, 0
        %1302 = vmatprep.subr.bf16.mxu0 0
        %1303 = vmatpush1.bf16.msra.mxu0 0
        %1304 = vmatprep.subr.bf16.mxu0 0
        %1305 = vmatpush1.bf16.msra.mxu0 0
        %1306 = vmatprep.subr.bf16.mxu0 0
        %1307 = vmatpush1.bf16.msra.mxu0 0
        %1308 = vmatprep.subr.bf16.mxu0 0
        %1309 = vmatpush1.bf16.msra.mxu0 0
        %1310 = vmatprep.subr.bf16.mxu0 0
        %1311 = vmatpush1.bf16.msra.mxu0 0
        %1312 = vmatprep.subr.bf16.mxu0 0
        %1313 = vmatpush1.bf16.msra.mxu0 0
        %1314 = vmatprep.subr.bf16.mxu0 0
        %1315 = vmatpush1.bf16.msra.mxu0 0
        %1316 = vmatprep.subr.bf16.mxu0 0
        %1317 = vmatpush1.bf16.msra.mxu0 %v1300
        %1318 = vmatprep.subr.bf16.mxu0 0
        %1319 = vmatpush2.bf16.msra.mxu0 0
        %1320 = vmatprep.subr.bf16.mxu0 0
        %1321 = vmatpush2.bf16.msra.mxu0 0
        %1322 = vmatprep.subr.bf16.mxu0 0
        %1323 = vmatpush2.bf16.msra.mxu0 0
        %1324 = vmatprep.subr.bf16.mxu0 0
        %1325 = vmatpush2.bf16.msra.mxu0 0
        %1326 = vmatprep.subr.bf16.mxu0 0
        %1327 = vmatpush2.bf16.msra.mxu0 0
        %1328 = vmatprep.subr.bf16.mxu0 0
        %1329 = vmatpush2.bf16.msra.mxu0 0
        %1330 = vmatprep.subr.bf16.mxu0 0
        %1331 = vmatpush2.bf16.msra.mxu0 0
        %1332 = vmatprep.subr.bf16.mxu0 0
        %1333 = vmatpush2.bf16.msra.mxu0 0
        %1334 = vmatprep.mubr.bf16.mxu0 0
        %1335 = vmatmul.mubr.bf16.gmra.mxu0 %v1297
        %v1336 = vpop.f32.mrf.mxu0
        %v1337 = vadd.f32 %v1294, %v1336
        %v1338 = vpop.f32.mrf.mxu0
        %v1339 = vpop.f32.mrf.mxu0
        %v1340 = vpop.f32.mrf.mxu0
        %1341 = vdwg.mxu0
        %v1342 = vmax.f32 %v1337, 0.0
        %v1343 = vpack.c.bf16 %v1279, %v1279
        %v1344 = vpack.c.bf16 %v1286, %v1286
        %v1345 = vld [vmem:[%s703] sm:$0xf]
        %v1346 = vld [vmem:[%s703 + $0x4] sm:$0xf]
        %v1347 = vld [vmem:[%s703 + $0x8] sm:$0xf]
        %v1348 = vld [vmem:[%s703 + $0xc] sm:$0xf]
        %v1349 = vld [vmem:[%s703 + $0x10] sm:$0xf]
        %v1350 = vld [vmem:[%s703 + $0x14] sm:$0xf]
        %v1351 = vld [vmem:[%s703 + $0x18] sm:$0xf]
        %v1352 = vld [vmem:[%s703 + $0x1c] sm:$0xf]
        %v1353 = vld [vmem:[%s703 + $0x20] sm:$0xf]
        %v1354 = vld [vmem:[%s703 + $0x24] sm:$0xf]
        %v1355 = vld [vmem:[%s703 + $0x28] sm:$0xf]
        %v1356 = vld [vmem:[%s703 + $0x2c] sm:$0xf]
        %v1357 = vld [vmem:[%s703 + $0x30] sm:$0xf]
        %v1358 = vld [vmem:[%s703 + $0x34] sm:$0xf]
        %v1359 = vld [vmem:[%s703 + $0x38] sm:$0xf]
        %v1360 = vld [vmem:[%s703 + $0x3c] sm:$0xf]
        %v1361 = vpack.c.bf16 %v1177, %v1177
        %v1362 = vld [vmem:[%s712] sm:$0xf]
        %v1363 = vld [vmem:[%s712 + $0x4] sm:$0xf]
        %v1364 = vld [vmem:[%s712 + $0x8] sm:$0xf]
        %v1365 = vld [vmem:[%s712 + $0xc] sm:$0xf]
        %v1366 = vld [vmem:[%s712 + $0x10] sm:$0xf]
        %v1367 = vld [vmem:[%s712 + $0x14] sm:$0xf]
        %v1368 = vld [vmem:[%s712 + $0x18] sm:$0xf]
        %v1369 = vld [vmem:[%s712 + $0x1c] sm:$0xf]
        %v1370 = vld [vmem:[%s712 + $0x20] sm:$0xf]
        %v1371 = vld [vmem:[%s712 + $0x24] sm:$0xf]
        %v1372 = vld [vmem:[%s712 + $0x28] sm:$0xf]
        %v1373 = vld [vmem:[%s712 + $0x2c] sm:$0xf]
        %v1374 = vld [vmem:[%s712 + $0x30] sm:$0xf]
        %v1375 = vld [vmem:[%s712 + $0x34] sm:$0xf]
        %v1376 = vld [vmem:[%s712 + $0x38] sm:$0xf]
        %v1377 = vld [vmem:[%s712 + $0x3c] sm:$0xf]
        %v1394 = vunpack.c.l.b16 %v1362
        %v1395 = vunpack.c.l.b16 %v1363
        %v1396 = vunpack.c.l.b16 %v1364
        %v1397 = vunpack.c.l.b16 %v1365
        %v1398 = vunpack.c.l.b16 %v1366
        %v1399 = vunpack.c.l.b16 %v1367
        %v1400 = vunpack.c.l.b16 %v1368
        %v1401 = vunpack.c.l.b16 %v1369
        %v1402 = vunpack.c.l.b16 %v1370
        %v1403 = vunpack.c.l.b16 %v1371
        %v1404 = vunpack.c.l.b16 %v1372
        %v1405 = vunpack.c.l.b16 %v1373
        %v1406 = vunpack.c.l.b16 %v1374
        %v1407 = vunpack.c.l.b16 %v1375
        %v1408 = vunpack.c.l.b16 %v1376
        %v1409 = vunpack.c.l.b16 %v1377
        %v1410 = vpack.c.b16 %v1395, %v1394
        %v1411 = vpack.c.b16 %v1397, %v1396
        %v1412 = vpack.c.b16 %v1399, %v1398
        %v1413 = vpack.c.b16 %v1401, %v1400
        %v1414 = vpack.c.b16 %v1403, %v1402
        %v1415 = vpack.c.b16 %v1405, %v1404
        %v1416 = vpack.c.b16 %v1407, %v1406
        %v1417 = vpack.c.b16 %v1409, %v1408
        %1426 = vmatprep.subr.bf16.mxu0 0
        %1427 = vmatpush1.bf16.msra.mxu0 %v1417
        %1428 = vmatprep.subr.bf16.mxu0 0
        %1429 = vmatpush1.bf16.msra.mxu0 %v1416
        %1430 = vmatprep.subr.bf16.mxu0 0
        %1431 = vmatpush1.bf16.msra.mxu0 %v1415
        %1432 = vmatprep.subr.bf16.mxu0 0
        %1433 = vmatpush1.bf16.msra.mxu0 %v1414
        %1434 = vmatprep.subr.bf16.mxu0 0
        %1435 = vmatpush1.bf16.msra.mxu0 %v1413
        %1436 = vmatprep.subr.bf16.mxu0 0
        %1437 = vmatpush1.bf16.msra.mxu0 %v1412
        %1438 = vmatprep.subr.bf16.mxu0 0
        %1439 = vmatpush1.bf16.msra.mxu0 %v1411
        %1440 = vmatprep.subr.bf16.mxu0 0
        %1441 = vmatpush1.bf16.msra.mxu0 %v1410
        %1442 = vmatprep.subr.bf16.mxu0 0
        %1443 = vmatpush2.bf16.msra.mxu0 0
        %1444 = vmatprep.subr.bf16.mxu0 0
        %1445 = vmatpush2.bf16.msra.mxu0 0
        %1446 = vmatprep.subr.bf16.mxu0 0
        %1447 = vmatpush2.bf16.msra.mxu0 0
        %1448 = vmatprep.subr.bf16.mxu0 0
        %1449 = vmatpush2.bf16.msra.mxu0 0
        %1450 = vmatprep.subr.bf16.mxu0 0
        %1451 = vmatpush2.bf16.msra.mxu0 0
        %1452 = vmatprep.subr.bf16.mxu0 0
        %1453 = vmatpush2.bf16.msra.mxu0 0
        %1454 = vmatprep.subr.bf16.mxu0 0
        %1455 = vmatpush2.bf16.msra.mxu0 0
        %1456 = vmatprep.subr.bf16.mxu0 0
        %1457 = vmatpush2.bf16.msra.mxu0 0
        %1458 = vmatprep.mubr.bf16.mxu0 0
        %1459 = vmatmul.mubr.bf16.gmra.mxu0 %v1361
        %v1460 = vpop.f32.mrf.mxu0
        %v1461 = vadd.f32 0.0, %v1460
        %v1462 = vpop.f32.mrf.mxu0
        %v1463 = vpop.f32.mrf.mxu0
        %v1464 = vpop.f32.mrf.mxu0
        %1465 = vdwg.mxu0
        %v1468 = vunpack.c.l.b16 %v1343
        %v1469 = vunpack.c.l.b16 %v1344
        %vm1470 = vcmask 1041409
        %v1471 = vsel %vm1470, %v1469, %v1468
        %v1472 = vpack.c.b16 %v1471, %v1471
        %v1490 = vunpack.c.l.b16 %v1345
        %v1491 = vunpack.c.l.b16 %v1346
        %v1492 = vunpack.c.l.b16 %v1347
        %v1493 = vunpack.c.l.b16 %v1348
        %v1494 = vunpack.c.l.b16 %v1349
        %v1495 = vunpack.c.l.b16 %v1350
        %v1496 = vunpack.c.l.b16 %v1351
        %v1497 = vunpack.c.l.b16 %v1352
        %v1498 = vunpack.c.l.b16 %v1353
        %v1499 = vunpack.c.l.b16 %v1354
        %v1500 = vunpack.c.l.b16 %v1355
        %v1501 = vunpack.c.l.b16 %v1356
        %v1502 = vunpack.c.l.b16 %v1357
        %v1503 = vunpack.c.l.b16 %v1358
        %v1504 = vunpack.c.l.b16 %v1359
        %v1505 = vunpack.c.l.b16 %v1360
        %v1506 = vpack.c.b16 %v1491, %v1490
        %v1507 = vpack.c.b16 %v1493, %v1492
        %v1508 = vpack.c.b16 %v1495, %v1494
        %v1509 = vpack.c.b16 %v1497, %v1496
        %v1510 = vpack.c.b16 %v1499, %v1498
        %v1511 = vpack.c.b16 %v1501, %v1500
        %v1512 = vpack.c.b16 %v1503, %v1502
        %v1513 = vpack.c.b16 %v1505, %v1504
        %1522 = vmatprep.subr.bf16.mxu0 0
        %1523 = vmatpush1.bf16.msra.mxu0 %v1513
        %1524 = vmatprep.subr.bf16.mxu0 0
        %1525 = vmatpush1.bf16.msra.mxu0 %v1512
        %1526 = vmatprep.subr.bf16.mxu0 0
        %1527 = vmatpush1.bf16.msra.mxu0 %v1511
        %1528 = vmatprep.subr.bf16.mxu0 0
        %1529 = vmatpush1.bf16.msra.mxu0 %v1510
        %1530 = vmatprep.subr.bf16.mxu0 0
        %1531 = vmatpush1.bf16.msra.mxu0 %v1509
        %1532 = vmatprep.subr.bf16.mxu0 0
        %1533 = vmatpush1.bf16.msra.mxu0 %v1508
        %1534 = vmatprep.subr.bf16.mxu0 0
        %1535 = vmatpush1.bf16.msra.mxu0 %v1507
        %1536 = vmatprep.subr.bf16.mxu0 0
        %1537 = vmatpush1.bf16.msra.mxu0 %v1506
        %1538 = vmatprep.subr.bf16.mxu0 0
        %1539 = vmatpush2.bf16.msra.mxu0 0
        %1540 = vmatprep.subr.bf16.mxu0 0
        %1541 = vmatpush2.bf16.msra.mxu0 0
        %1542 = vmatprep.subr.bf16.mxu0 0
        %1543 = vmatpush2.bf16.msra.mxu0 0
        %1544 = vmatprep.subr.bf16.mxu0 0
        %1545 = vmatpush2.bf16.msra.mxu0 0
        %1546 = vmatprep.subr.bf16.mxu0 0
        %1547 = vmatpush2.bf16.msra.mxu0 0
        %1548 = vmatprep.subr.bf16.mxu0 0
        %1549 = vmatpush2.bf16.msra.mxu0 0
        %1550 = vmatprep.subr.bf16.mxu0 0
        %1551 = vmatpush2.bf16.msra.mxu0 0
        %1552 = vmatprep.subr.bf16.mxu0 0
        %1553 = vmatpush2.bf16.msra.mxu0 0
        %1554 = vmatprep.mubr.bf16.mxu0 0
        %1555 = vmatmul.mubr.bf16.gmra.mxu0 %v1472
        %v1556 = vpop.f32.mrf.mxu0
        %v1557 = vadd.f32 %v1461, %v1556
        %v1558 = vpop.f32.mrf.mxu0
        %v1559 = vpop.f32.mrf.mxu0
        %v1560 = vpop.f32.mrf.mxu0
        %1561 = vdwg.mxu0
        %v1562 = vpack.c.bf16 %v1342, %v1342
        %v1563 = vld [vmem:[%s721] sm:$0xf]
        %v1564 = vld [vmem:[%s721 + $0x4] sm:$0xf]
        %v1565 = vld [vmem:[%s721 + $0x8] sm:$0xf]
        %v1566 = vld [vmem:[%s721 + $0xc] sm:$0xf]
        %v1571 = vunpack.c.l.b16 %v1563
        %v1572 = vunpack.c.l.b16 %v1564
        %v1573 = vunpack.c.l.b16 %v1565
        %v1574 = vunpack.c.l.b16 %v1566
        %v1575 = vpack.c.b16 %v1572, %v1571
        %v1576 = vpack.c.b16 %v1574, %v1573
        %vm1579 = vcmask 261120
        %v1581 = vsel %vm1579, %v1562, 0
        %1583 = vmatprep.subr.bf16.mxu0 0
        %1584 = vmatpush1.bf16.msra.mxu0 0
        %1585 = vmatprep.subr.bf16.mxu0 0
        %1586 = vmatpush1.bf16.msra.mxu0 0
        %1587 = vmatprep.subr.bf16.mxu0 0
        %1588 = vmatpush1.bf16.msra.mxu0 0
        %1589 = vmatprep.subr.bf16.mxu0 0
        %1590 = vmatpush1.bf16.msra.mxu0 0
        %1591 = vmatprep.subr.bf16.mxu0 0
        %1592 = vmatpush1.bf16.msra.mxu0 0
        %1593 = vmatprep.subr.bf16.mxu0 0
        %1594 = vmatpush1.bf16.msra.mxu0 0
        %1595 = vmatprep.subr.bf16.mxu0 0
        %1596 = vmatpush1.bf16.msra.mxu0 %v1576
        %1597 = vmatprep.subr.bf16.mxu0 0
        %1598 = vmatpush1.bf16.msra.mxu0 %v1575
        %1599 = vmatprep.subr.bf16.mxu0 0
        %1600 = vmatpush2.bf16.msra.mxu0 0
        %1601 = vmatprep.subr.bf16.mxu0 0
        %1602 = vmatpush2.bf16.msra.mxu0 0
        %1603 = vmatprep.subr.bf16.mxu0 0
        %1604 = vmatpush2.bf16.msra.mxu0 0
        %1605 = vmatprep.subr.bf16.mxu0 0
        %1606 = vmatpush2.bf16.msra.mxu0 0
        %1607 = vmatprep.subr.bf16.mxu0 0
        %1608 = vmatpush2.bf16.msra.mxu0 0
        %1609 = vmatprep.subr.bf16.mxu0 0
        %1610 = vmatpush2.bf16.msra.mxu0 0
        %1611 = vmatprep.subr.bf16.mxu0 0
        %1612 = vmatpush2.bf16.msra.mxu0 0
        %1613 = vmatprep.subr.bf16.mxu0 0
        %1614 = vmatpush2.bf16.msra.mxu0 0
        %1615 = vmatprep.mubr.bf16.mxu0 0
        %1616 = vmatmul.mubr.bf16.gmra.mxu0 %v1581
        %v1617 = vpop.f32.mrf.mxu0
        %v1618 = vadd.f32 0.0, %v1617
        %v1619 = vpop.f32.mrf.mxu0
        %v1620 = vpop.f32.mrf.mxu0
        %v1621 = vpop.f32.mrf.mxu0
        %1622 = vdwg.mxu0
        %v1623 = vadd.f32 %v1557, %v1618
        %v1624 = vld [vmem:[%s729] sm:$0x1]
        %v1626 = vlaneseq
        %v1627 = vshrl.u32 %v1626, 7
        %v1628 = vsub.s32 0, %v1627
        %v1629 = vrot.slane %v1624, %v1628
        %v1631 = vadd.f32 %v1623, %v1629
        %v1632 = vmax.f32 %v1631, 0.0
        %v1633 = vpack.c.bf16 %v1632, %v1632
        %v1634 = vld [vmem:[%s850] sm:$0xf]
        %v1635 = vld [vmem:[%s850 + $0x4] sm:$0xf]
        %v1636 = vld [vmem:[%s850 + $0x8] sm:$0xf]
        %v1637 = vld [vmem:[%s850 + $0xc] sm:$0xf]
        %v1638 = vld [vmem:[%s850 + $0x10] sm:$0xf]
        %v1639 = vld [vmem:[%s850 + $0x14] sm:$0xf]
        %v1640 = vld [vmem:[%s850 + $0x18] sm:$0xf]
        %v1641 = vld [vmem:[%s850 + $0x1c] sm:$0xf]
        %v1642 = vld [vmem:[%s850 + $0x20] sm:$0xf]
        %v1643 = vld [vmem:[%s850 + $0x24] sm:$0xf]
        %v1644 = vld [vmem:[%s850 + $0x28] sm:$0xf]
        %v1645 = vld [vmem:[%s850 + $0x2c] sm:$0xf]
        %v1646 = vld [vmem:[%s850 + $0x30] sm:$0xf]
        %v1647 = vld [vmem:[%s850 + $0x34] sm:$0xf]
        %v1648 = vld [vmem:[%s850 + $0x38] sm:$0xf]
        %v1649 = vld [vmem:[%s850 + $0x3c] sm:$0xf]
        %v1650 = vld [vmem:[%s737] sm:$0x1]
        %v1652 = vlaneseq
        %v1653 = vshrl.u32 %v1652, 7
        %v1654 = vsub.s32 0, %v1653
        %v1655 = vrot.slane %v1650, %v1654
        %v1673 = vunpack.c.l.b16 %v1634
        %v1674 = vunpack.c.l.b16 %v1635
        %v1675 = vunpack.c.l.b16 %v1636
        %v1676 = vunpack.c.l.b16 %v1637
        %v1677 = vunpack.c.l.b16 %v1638
        %v1678 = vunpack.c.l.b16 %v1639
        %v1679 = vunpack.c.l.b16 %v1640
        %v1680 = vunpack.c.l.b16 %v1641
        %v1681 = vunpack.c.l.b16 %v1642
        %v1682 = vunpack.c.l.b16 %v1643
        %v1683 = vunpack.c.l.b16 %v1644
        %v1684 = vunpack.c.l.b16 %v1645
        %v1685 = vunpack.c.l.b16 %v1646
        %v1686 = vunpack.c.l.b16 %v1647
        %v1687 = vunpack.c.l.b16 %v1648
        %v1688 = vunpack.c.l.b16 %v1649
        %v1689 = vpack.c.b16 %v1674, %v1673
        %v1690 = vpack.c.b16 %v1676, %v1675
        %v1691 = vpack.c.b16 %v1678, %v1677
        %v1692 = vpack.c.b16 %v1680, %v1679
        %v1693 = vpack.c.b16 %v1682, %v1681
        %v1694 = vpack.c.b16 %v1684, %v1683
        %v1695 = vpack.c.b16 %v1686, %v1685
        %v1696 = vpack.c.b16 %v1688, %v1687
        %1705 = vmatprep.subr.bf16.mxu0 0
        %1706 = vmatpush1.bf16.msra.mxu0 %v1696
        %1707 = vmatprep.subr.bf16.mxu0 0
        %1708 = vmatpush1.bf16.msra.mxu0 %v1695
        %1709 = vmatprep.subr.bf16.mxu0 0
        %1710 = vmatpush1.bf16.msra.mxu0 %v1694
        %1711 = vmatprep.subr.bf16.mxu0 0
        %1712 = vmatpush1.bf16.msra.mxu0 %v1693
        %1713 = vmatprep.subr.bf16.mxu0 0
        %1714 = vmatpush1.bf16.msra.mxu0 %v1692
        %1715 = vmatprep.subr.bf16.mxu0 0
        %1716 = vmatpush1.bf16.msra.mxu0 %v1691
        %1717 = vmatprep.subr.bf16.mxu0 0
        %1718 = vmatpush1.bf16.msra.mxu0 %v1690
        %1719 = vmatprep.subr.bf16.mxu0 0
        %1720 = vmatpush1.bf16.msra.mxu0 %v1689
        %1721 = vmatprep.subr.bf16.mxu0 0
        %1722 = vmatpush2.bf16.msra.mxu0 0
        %1723 = vmatprep.subr.bf16.mxu0 0
        %1724 = vmatpush2.bf16.msra.mxu0 0
        %1725 = vmatprep.subr.bf16.mxu0 0
        %1726 = vmatpush2.bf16.msra.mxu0 0
        %1727 = vmatprep.subr.bf16.mxu0 0
        %1728 = vmatpush2.bf16.msra.mxu0 0
        %1729 = vmatprep.subr.bf16.mxu0 0
        %1730 = vmatpush2.bf16.msra.mxu0 0
        %1731 = vmatprep.subr.bf16.mxu0 0
        %1732 = vmatpush2.bf16.msra.mxu0 0
        %1733 = vmatprep.subr.bf16.mxu0 0
        %1734 = vmatpush2.bf16.msra.mxu0 0
        %1735 = vmatprep.subr.bf16.mxu0 0
        %1736 = vmatpush2.bf16.msra.mxu0 0
        %1737 = vmatprep.mubr.bf16.mxu0 0
        %1738 = vmatmul.mubr.bf16.gmra.mxu0 %v1633
        %v1739 = vpop.f32.mrf.mxu0
        %v1740 = vadd.f32 %v1655, %v1739
        %v1741 = vpop.f32.mrf.mxu0
        %v1742 = vpop.f32.mrf.mxu0
        %v1743 = vpop.f32.mrf.mxu0
        %1744 = vdwg.mxu0
        %vm1745 = vcmask 25600
        %1746 = vst.msk [vmem:[%s854] sm:$0x3] %vm1745, %v1740
        %p1747 = scmp.lt.s32.totalorder %s42, 2
        %s1748 = scalar_select %p1747, %s42, 2
        %s1749 = smul.addr %s1748, 2
        %s1750 = scalar_lea.vmem %s16, %s1749
        // Predicated region
        $region117: #{ensemble_forward.1} parent=83 // pred_check
          %p1751 = pneg %p456
        $region118: #{ensemble_forward.1} parent=83 // pred_check_branch
          %1753 = sbr.rel (%p1751) target = $region120
        $region119: #{ensemble_forward.1} parent=83 // pred_region
          _
        $region120: #{ensemble_forward.1} parent=83 // pred_fallthru
          _
      $region84: #{ensemble_forward.1} parent=5 // pred_fallthru
        _
      %p1754 = scmp.le.s32.totalorder 2, %s37
      // Predicated region
      $region121: #{ensemble_forward.1} parent=5 // pred_check
        %p1755 = pneg %p1754
      $region122: #{ensemble_forward.1} parent=5 // pred_check_branch
        %1757 = sbr.rel (%p1755) target = $region124
      $region123: #{ensemble_forward.1} parent=5 // pred_region
        %s1758 = ssub.s32 %s37, 2
        // Predicated region
        $region125: #{ensemble_forward.1} parent=123 // pred_check
          %p1759 = pneg %p462
        $region126: #{ensemble_forward.1} parent=123 // pred_check_branch
          %1761 = sbr.rel (%p1759) target = $region128
        $region127: #{ensemble_forward.1} parent=123 // pred_region
          %p1762 = scmp.lt.s32.totalorder %s43, 2
          %s1763 = scalar_select %p1762, %s43, 2
          %s1764 = smul.addr %s1763, 2
          %s1765 = scalar_lea.vmem %s16, %s1764
        $region128: #{ensemble_forward.1} parent=123 // pred_fallthru
          _
      $region124: #{ensemble_forward.1} parent=5 // pred_fallthru
        _
    $region6: #{ensemble_forward.1} parent=1 // loop_footer
      %s41 = sadd.s32 1, %s37
    $region7: #{ensemble_forward.1} parent=1 // loop_footer_branch
      %36 = sbr.rel target = $region3
    $region8: #{ensemble_forward.1} parent=1 // loop_exit
      _
    %1766 = vsyncpa [#allocation3], 1
    %s1767 = scalar_lea.sflag [#allocation3], 1
    %1768 = vsyncpa %s1767, 1
    %1769 = vsyncpa [#allocation5], 1
    %s1770 = scalar_lea.sflag [#allocation5], 1
    %1771 = vsyncpa %s1770, 1
    %1772 = vsyncpa [#allocation8], 1
    %s1773 = scalar_lea.sflag [#allocation8], 1
    %1774 = vsyncpa %s1773, 1
    %1775 = vsyncpa [#allocation11], 1
    %s1776 = scalar_lea.sflag [#allocation11], 1
    %1777 = vsyncpa %s1776, 1
    %1778 = vsyncpa [#allocation14], 1
    %s1779 = scalar_lea.sflag [#allocation14], 1
    %1780 = vsyncpa %s1779, 1

</llo_original>
